<compile_context>
chip_gen: v5e
topology: v5e:2x2
jax: 0.10.0
libtpu: 0.0.40
codegen_flags: <defaults>
</compile_context>

<pallas_src>
import functools

import jax
import jax.numpy as jnp
from jax.experimental import pallas as pl
from jax.experimental.pallas import tpu as pltpu

KSIZE = 7
PAD = 3


def _cbam_kernel(x_ref, w1_ref, w2t_ref, mask_ref, wsa_ref, o_ref, pad_ref,
                 *, H, W, L):
    HW = H * W
    x = x_ref[...].astype(jnp.float32)                      # (Bt, C, HW)
    Bt, C, _ = x.shape

    # ---------------- Channel attention (VPU only) ----------------
    avg = jnp.sum(x, axis=2) * (1.0 / HW)                   # (Bt, C)
    mx = jnp.max(x, axis=2)                                 # (Bt, C)

    w1 = w1_ref[...].astype(jnp.float32)                    # (Cr, C)
    w2t = w2t_ref[...].astype(jnp.float32)                  # (Cr, C)  (= w2.T)

    # fc1 + ReLU : h[b, r] = relu(sum_c pooled[b, c] * w1[r, c])
    h_a = jnp.maximum(jnp.sum(avg[:, None, :] * w1[None, :, :], axis=2), 0.0)
    h_m = jnp.maximum(jnp.sum(mx[:, None, :] * w1[None, :, :], axis=2), 0.0)
    # fc2 : out[b, c] = sum_r h[b, r] * w2[c, r] = sum_r h[b, r] * w2t[r, c]
    o_a = jnp.sum(h_a[:, :, None] * w2t[None, :, :], axis=1)    # (Bt, C)
    o_m = jnp.sum(h_m[:, :, None] * w2t[None, :, :], axis=1)    # (Bt, C)
    ca = jax.nn.sigmoid(o_a + o_m)                           # (Bt, C)

    x_ca = x * ca[:, :, None]                                # (Bt, C, HW)

    # ---------------- Spatial attention ----------------
    avg_c = jnp.sum(x_ca, axis=1) * (1.0 / C)                # (Bt, HW)
    max_c = jnp.max(x_ca, axis=1)                            # (Bt, HW)

    # Zero-padded flat conv buffer: interior at [L, L+HW); L >= 3*W+3 zeros on
    # each side so vertically out-of-range taps read zeros for free.  L is a
    # multiple of 128, so the interior stores are unmasked full-lane stores.
    pad_ref[...] = jnp.zeros_like(pad_ref)
    pad_ref[0, :, L:L + HW] = avg_c
    pad_ref[1, :, L:L + HW] = max_c
    fp0 = pad_ref[0]                                         # (Bt, HWP)
    fp1 = pad_ref[1]                                         # (Bt, HWP)

    mvals = mask_ref[...].astype(jnp.float32)                # (7, HW) column masks

    # 7x7 cross-correlation as 98 lane-shifted taps.  Per-dj groups with two
    # independent accumulators (one per conv input channel) break the long
    # dependent add chain; the per-dj column mask kills row-wrap terms.
    conv = jnp.zeros((Bt, HW), jnp.float32)
    for dj in range(KSIZE):
        dx = dj - PAD
        acc0 = jnp.zeros((Bt, HW), jnp.float32)
        acc1 = jnp.zeros((Bt, HW), jnp.float32)
        for di in range(KSIZE):
            base = L + (di - PAD) * W + dx
            acc0 = acc0 + wsa_ref[di * KSIZE + dj] * fp0[:, base:base + HW]
            acc1 = acc1 + wsa_ref[KSIZE * KSIZE + di * KSIZE + dj] * fp1[:, base:base + HW]
        conv = conv + (acc0 + acc1) * mvals[dj:dj + 1, :]
    sa = jax.nn.sigmoid(conv)                                # (Bt, HW)

    o_ref[...] = (x_ca * sa[:, None, :]).astype(o_ref.dtype)


def _pick_batch_tile(B, per_image_bytes, target=512 * 1024, cap=4 * 1024 * 1024):
    """Largest divisor of B keeping the block under `cap`, preferring >= target."""
    best = 1
    for d in range(1, B + 1):
        if B % d:
            continue
        if d * per_image_bytes <= cap:
            best = d
        if d * per_image_bytes >= target:
            break
    return best


def cbam_forward(x, w1, w2, w_sa):
    """x: (B, C, H, W); w1: (Cr, C); w2: (C, Cr); w_sa: (1, 2, 7, 7)."""
    B, C, H, W = x.shape
    Cr = w1.shape[0]
    HW = H * W

    x_flat = x.reshape(B, C, HW)                      # lane-dense layout
    w2t = jnp.transpose(w2)                           # (Cr, C)
    wsa_flat = w_sa.reshape(-1).astype(jnp.float32)   # index = t*49 + di*7 + dj

    # Flat-padding geometry: need >= 3*W + 3 zeros on each side of the interior.
    pad_amt = PAD * W + PAD
    L = ((pad_amt + 127) // 128) * 128                # 128-aligned interior start
    HWP = ((L + HW + pad_amt + 127) // 128) * 128

    # Column-validity masks per horizontal tap offset dx = dj - 3 (constants).
    col = jnp.arange(HW, dtype=jnp.int32) % W
    masks = jnp.stack(
        [((col + (dj - PAD) >= 0) & (col + (dj - PAD) < W)) for dj in range(KSIZE)]
    ).astype(jnp.float32)                             # (7, HW)

    per_image = C * HW * x.dtype.itemsize
    Bt = _pick_batch_tile(B, per_image)
    block_bytes = Bt * per_image

    kernel = functools.partial(_cbam_kernel, H=H, W=W, L=L)

    grid_spec = pltpu.PrefetchScalarGridSpec(
        num_scalar_prefetch=0,
        grid=(B // Bt,),
        in_specs=[
            pl.BlockSpec((Bt, C, HW), lambda b: (b, 0, 0)),
            pl.BlockSpec((Cr, C), lambda b: (0, 0)),
            pl.BlockSpec((Cr, C), lambda b: (0, 0)),
            pl.BlockSpec((KSIZE, HW), lambda b: (0, 0)),
            pl.BlockSpec(memory_space=pltpu.MemorySpace.SMEM),
        ],
        out_specs=pl.BlockSpec((Bt, C, HW), lambda b: (b, 0, 0)),
        scratch_shapes=[pltpu.VMEM((2, Bt, HWP), jnp.float32)],
    )
    out_flat = pl.pallas_call(
        kernel,
        out_shape=jax.ShapeDtypeStruct((B, C, HW), x.dtype),
        grid_spec=grid_spec,
        compiler_params=pltpu.CompilerParams(
            dimension_semantics=("parallel",),
            # Generous but within physical VMEM on every generation (>= v5e).
            vmem_limit_bytes=int(min(64 * 2**20, max(32 * 2**20, 8 * block_bytes))),
        ),
    )(x_flat, w1, w2t, masks, wsa_flat)
    return out_flat.reshape(B, C, H, W)


def cbam_reference(x, w1, w2, w_sa):
    """Pure-JAX reference matching the PyTorch CBAM forward."""
    avg = jnp.mean(x, axis=(2, 3), keepdims=True)
    mx = jnp.max(x, axis=(2, 3), keepdims=True)

    def mlp(p):
        h = jnp.einsum('oc,bcij->boij', w1, p)
        h = jnp.maximum(h, 0.0)
        return jnp.einsum('oc,bcij->boij', w2, h)

    ca = jax.nn.sigmoid(mlp(avg) + mlp(mx))
    x = x * ca

    avg_c = jnp.mean(x, axis=1, keepdims=True)
    max_c = jnp.max(x, axis=1, keepdims=True)
    f = jnp.concatenate([avg_c, max_c], axis=1)
    conv = jax.lax.conv_general_dilated(
        f, w_sa, window_strides=(1, 1), padding=((PAD, PAD), (PAD, PAD)),
        dimension_numbers=('NCHW', 'OIHW', 'NCHW'))
    sa = jax.nn.sigmoid(conv)
    return x * sa


if __name__ == "__main__":
    key = jax.random.PRNGKey(0)
    B, C, H, W = 2, 32, 16, 16
    ratio = 16
    Cr = C // ratio                                    # = 2
    k1, k2, k3, k4 = jax.random.split(key, 4)

    x = jax.random.normal(k1, (B, C, H, W), jnp.float32)
    w1 = jax.random.normal(k2, (Cr, C), jnp.float32) * 0.1     # fc1 (1x1 conv)
    w2 = jax.random.normal(k3, (C, Cr), jnp.float32) * 0.1     # fc2 (1x1 conv)
    w_sa = jax.random.normal(k4, (1, 2, KSIZE, KSIZE), jnp.float32) * 0.1

    out = cbam_forward(x, w1, w2, w_sa)
    out = jax.block_until_ready(out)

    ref = cbam_reference(x, w1, w2, w_sa)
    max_err = float(jnp.max(jnp.abs(out - ref)))
    assert out.shape == (B, C, H, W)
    assert max_err < 1e-3, f"max abs error {max_err}"
    print("KERNEL_OK")
</pallas_src>

<mosaic_0001>
module attributes {stable_mosaic.version = 11 : i64} {
  func.func @_cbam_kernel(%arg0: i32, %arg1: memref<2x32x256xf32, #tpu.memory_space<vmem>>, %arg2: memref<2x32xf32, #tpu.memory_space<vmem>>, %arg3: memref<2x32xf32, #tpu.memory_space<vmem>>, %arg4: memref<7x256xf32, #tpu.memory_space<vmem>>, %arg5: memref<98xf32, #tpu.memory_space<smem>>, %arg6: memref<2x32x256xf32, #tpu.memory_space<vmem>>, %arg7: memref<2x2x512xf32, #tpu.memory_space<vmem>>) attributes {dimension_semantics = [#tpu.dimension_semantics<parallel>], iteration_bounds = array<i64: 1>, scalar_prefetch = 0 : i64, scratch_operands = 1 : i64, tpu.core_type = #tpu.core_type<tc>, window_params = [{transform_indices = @transform_0, window_bounds = array<i64: 2, 32, 256>}, {pipeline_mode = #tpu.pipeline_mode<synchronous>, transform_indices = @transform_1, window_bounds = array<i64: 2, 32>}, {pipeline_mode = #tpu.pipeline_mode<synchronous>, transform_indices = @transform_2, window_bounds = array<i64: 2, 32>}, {pipeline_mode = #tpu.pipeline_mode<synchronous>, transform_indices = @transform_3, window_bounds = array<i64: 7, 256>}, {transform_indices = @transform_4, window_bounds = array<i64: 98>}, {transform_indices = @transform_5, window_bounds = array<i64: 2, 32, 256>}]} {
    %c0 = arith.constant 0 : index
    %c0_0 = arith.constant 0 : index
    %c0_1 = arith.constant 0 : index
    %0 = vector.load %arg1[%c0, %c0_0, %c0_1] : memref<2x32x256xf32, #tpu.memory_space<vmem>>, vector<2x32x256xf32>
    %cst = arith.constant dense<0.000000e+00> : vector<2x32xf32>
    %1 = vector.multi_reduction <add>, %0, %cst [2] : vector<2x32x256xf32> to vector<2x32xf32>
    %cst_2 = arith.constant 3.906250e-03 : f32
    %2 = vector.broadcast %cst_2 : f32 to vector<2x32xf32>
    %3 = arith.mulf %1, %2 : vector<2x32xf32>
    %cst_3 = arith.constant dense<0xFF800000> : vector<2x32xf32>
    %4 = vector.multi_reduction <maximumf>, %0, %cst_3 [2] : vector<2x32x256xf32> to vector<2x32xf32>
    %c0_4 = arith.constant 0 : index
    %c0_5 = arith.constant 0 : index
    %5 = vector.load %arg2[%c0_4, %c0_5] : memref<2x32xf32, #tpu.memory_space<vmem>>, vector<2x32xf32>
    %c0_6 = arith.constant 0 : index
    %c0_7 = arith.constant 0 : index
    %6 = vector.load %arg3[%c0_6, %c0_7] : memref<2x32xf32, #tpu.memory_space<vmem>>, vector<2x32xf32>
    %7 = vector.shape_cast %3 : vector<2x32xf32> to vector<2x1x32xf32>
    %8 = vector.shape_cast %5 : vector<2x32xf32> to vector<1x2x32xf32>
    %9 = vector.broadcast %7 : vector<2x1x32xf32> to vector<2x2x32xf32>
    %10 = vector.broadcast %8 : vector<1x2x32xf32> to vector<2x2x32xf32>
    %11 = arith.mulf %9, %10 : vector<2x2x32xf32>
    %cst_8 = arith.constant dense<0.000000e+00> : vector<2x2xf32>
    %12 = vector.multi_reduction <add>, %11, %cst_8 [2] : vector<2x2x32xf32> to vector<2x2xf32>
    %cst_9 = arith.constant 0.000000e+00 : f32
    %13 = vector.broadcast %cst_9 : f32 to vector<2x2xf32>
    %14 = arith.maximumf %12, %13 : vector<2x2xf32>
    %15 = vector.shape_cast %4 : vector<2x32xf32> to vector<2x1x32xf32>
    %16 = vector.shape_cast %5 : vector<2x32xf32> to vector<1x2x32xf32>
    %17 = vector.broadcast %15 : vector<2x1x32xf32> to vector<2x2x32xf32>
    %18 = vector.broadcast %16 : vector<1x2x32xf32> to vector<2x2x32xf32>
    %19 = arith.mulf %17, %18 : vector<2x2x32xf32>
    %cst_10 = arith.constant dense<0.000000e+00> : vector<2x2xf32>
    %20 = vector.multi_reduction <add>, %19, %cst_10 [2] : vector<2x2x32xf32> to vector<2x2xf32>
    %cst_11 = arith.constant 0.000000e+00 : f32
    %21 = vector.broadcast %cst_11 : f32 to vector<2x2xf32>
    %22 = arith.maximumf %20, %21 : vector<2x2xf32>
    %23 = vector.shape_cast %14 : vector<2x2xf32> to vector<2x2x1xf32>
    %24 = vector.shape_cast %6 : vector<2x32xf32> to vector<1x2x32xf32>
    %25 = vector.broadcast %23 : vector<2x2x1xf32> to vector<2x2x32xf32>
    %26 = vector.broadcast %24 : vector<1x2x32xf32> to vector<2x2x32xf32>
    %27 = arith.mulf %25, %26 : vector<2x2x32xf32>
    %cst_12 = arith.constant dense<0.000000e+00> : vector<2x32xf32>
    %28 = vector.multi_reduction <add>, %27, %cst_12 [1] : vector<2x2x32xf32> to vector<2x32xf32>
    %29 = vector.shape_cast %22 : vector<2x2xf32> to vector<2x2x1xf32>
    %30 = vector.shape_cast %6 : vector<2x32xf32> to vector<1x2x32xf32>
    %31 = vector.broadcast %29 : vector<2x2x1xf32> to vector<2x2x32xf32>
    %32 = vector.broadcast %30 : vector<1x2x32xf32> to vector<2x2x32xf32>
    %33 = arith.mulf %31, %32 : vector<2x2x32xf32>
    %cst_13 = arith.constant dense<0.000000e+00> : vector<2x32xf32>
    %34 = vector.multi_reduction <add>, %33, %cst_13 [1] : vector<2x2x32xf32> to vector<2x32xf32>
    %35 = arith.addf %28, %34 : vector<2x32xf32>
    %36 = arith.negf %35 : vector<2x32xf32>
    %37 = math.exp %36 : vector<2x32xf32>
    %cst_14 = arith.constant 1.000000e+00 : f32
    %38 = vector.broadcast %cst_14 : f32 to vector<2x32xf32>
    %39 = arith.addf %38, %37 : vector<2x32xf32>
    %40 = arith.divf %38, %39 : vector<2x32xf32>
    %41 = vector.shape_cast %40 : vector<2x32xf32> to vector<2x32x1xf32>
    %42 = vector.broadcast %41 : vector<2x32x1xf32> to vector<2x32x256xf32>
    %43 = arith.mulf %0, %42 : vector<2x32x256xf32>
    %cst_15 = arith.constant dense<0.000000e+00> : vector<2x256xf32>
    %44 = vector.multi_reduction <add>, %43, %cst_15 [1] : vector<2x32x256xf32> to vector<2x256xf32>
    %cst_16 = arith.constant 3.125000e-02 : f32
    %45 = vector.broadcast %cst_16 : f32 to vector<2x256xf32>
    %46 = arith.mulf %44, %45 : vector<2x256xf32>
    %cst_17 = arith.constant dense<0xFF800000> : vector<2x256xf32>
    %47 = vector.multi_reduction <maximumf>, %43, %cst_17 [1] : vector<2x32x256xf32> to vector<2x256xf32>
    %cst_18 = arith.constant 0.000000e+00 : f32
    %48 = vector.broadcast %cst_18 : f32 to vector<2x2x512xf32>
    %c0_19 = arith.constant 0 : index
    %c0_20 = arith.constant 0 : index
    %c0_21 = arith.constant 0 : index
    %49 = vector.load %arg7[%c0_19, %c0_20, %c0_21] : memref<2x2x512xf32, #tpu.memory_space<vmem>>, vector<2x2x512xf32>
    tpu.vector_store %arg7[%c0_19, %c0_20, %c0_21], %48 {strides = array<i32>} : memref<2x2x512xf32, #tpu.memory_space<vmem>>, vector<2x2x512xf32>,
    %c0_22 = arith.constant 0 : index
    %c0_23 = arith.constant 0 : index
    %c128 = arith.constant 128 : index
    %50 = vector.load %arg7[%c0_22, %c0_23, %c128] : memref<2x2x512xf32, #tpu.memory_space<vmem>>, vector<1x2x256xf32>
    %51 = vector.shape_cast %50 : vector<1x2x256xf32> to vector<2x256xf32>
    %52 = vector.shape_cast %46 : vector<2x256xf32> to vector<1x2x256xf32>
    tpu.vector_store %arg7[%c0_22, %c0_23, %c128], %52 {strides = array<i32>} : memref<2x2x512xf32, #tpu.memory_space<vmem>>, vector<1x2x256xf32>,
    %c1 = arith.constant 1 : index
    %c0_24 = arith.constant 0 : index
    %c128_25 = arith.constant 128 : index
    %53 = vector.load %arg7[%c1, %c0_24, %c128_25] : memref<2x2x512xf32, #tpu.memory_space<vmem>>, vector<1x2x256xf32>
    %54 = vector.shape_cast %53 : vector<1x2x256xf32> to vector<2x256xf32>
    %55 = vector.shape_cast %47 : vector<2x256xf32> to vector<1x2x256xf32>
    tpu.vector_store %arg7[%c1, %c0_24, %c128_25], %55 {strides = array<i32>} : memref<2x2x512xf32, #tpu.memory_space<vmem>>, vector<1x2x256xf32>,
    %c0_26 = arith.constant 0 : index
    %c0_27 = arith.constant 0 : index
    %c0_28 = arith.constant 0 : index
    %56 = vector.load %arg7[%c0_26, %c0_27, %c0_28] : memref<2x2x512xf32, #tpu.memory_space<vmem>>, vector<1x2x512xf32>
    %57 = vector.shape_cast %56 : vector<1x2x512xf32> to vector<2x512xf32>
    %c1_29 = arith.constant 1 : index
    %c0_30 = arith.constant 0 : index
    %c0_31 = arith.constant 0 : index
    %58 = vector.load %arg7[%c1_29, %c0_30, %c0_31] : memref<2x2x512xf32, #tpu.memory_space<vmem>>, vector<1x2x512xf32>
    %59 = vector.shape_cast %58 : vector<1x2x512xf32> to vector<2x512xf32>
    %c0_32 = arith.constant 0 : index
    %c0_33 = arith.constant 0 : index
    %60 = vector.load %arg4[%c0_32, %c0_33] : memref<7x256xf32, #tpu.memory_space<vmem>>, vector<7x256xf32>
    %cst_34 = arith.constant 0.000000e+00 : f32
    %61 = vector.broadcast %cst_34 : f32 to vector<2x256xf32>
    %cst_35 = arith.constant 0.000000e+00 : f32
    %62 = vector.broadcast %cst_35 : f32 to vector<2x256xf32>
    %cst_36 = arith.constant 0.000000e+00 : f32
    %63 = vector.broadcast %cst_36 : f32 to vector<2x256xf32>
    %c0_37 = arith.constant 0 : index
    %64 = memref.load %arg5[%c0_37] : memref<98xf32, #tpu.memory_space<smem>>
    %65 = vector.extract_strided_slice %57 {offsets = [0, 77], sizes = [2, 256], strides = [1, 1]} : vector<2x512xf32> to vector<2x256xf32>
    %66 = vector.broadcast %64 : f32 to vector<2x256xf32>
    %67 = arith.mulf %66, %65 : vector<2x256xf32>
    %68 = arith.addf %62, %67 : vector<2x256xf32>
    %c49 = arith.constant 49 : index
    %69 = memref.load %arg5[%c49] : memref<98xf32, #tpu.memory_space<smem>>
    %70 = vector.extract_strided_slice %59 {offsets = [0, 77], sizes = [2, 256], strides = [1, 1]} : vector<2x512xf32> to vector<2x256xf32>
    %71 = vector.broadcast %69 : f32 to vector<2x256xf32>
    %72 = arith.mulf %71, %70 : vector<2x256xf32>
    %73 = arith.addf %63, %72 : vector<2x256xf32>
    %c7 = arith.constant 7 : index
    %74 = memref.load %arg5[%c7] : memref<98xf32, #tpu.memory_space<smem>>
    %75 = vector.extract_strided_slice %57 {offsets = [0, 93], sizes = [2, 256], strides = [1, 1]} : vector<2x512xf32> to vector<2x256xf32>
    %76 = vector.broadcast %74 : f32 to vector<2x256xf32>
    %77 = arith.mulf %76, %75 : vector<2x256xf32>
    %78 = arith.addf %68, %77 : vector<2x256xf32>
    %c56 = arith.constant 56 : index
    %79 = memref.load %arg5[%c56] : memref<98xf32, #tpu.memory_space<smem>>
    %80 = vector.extract_strided_slice %59 {offsets = [0, 93], sizes = [2, 256], strides = [1, 1]} : vector<2x512xf32> to vector<2x256xf32>
    %81 = vector.broadcast %79 : f32 to vector<2x256xf32>
    %82 = arith.mulf %81, %80 : vector<2x256xf32>
    %83 = arith.addf %73, %82 : vector<2x256xf32>
    %c14 = arith.constant 14 : index
    %84 = memref.load %arg5[%c14] : memref<98xf32, #tpu.memory_space<smem>>
    %85 = vector.extract_strided_slice %57 {offsets = [0, 109], sizes = [2, 256], strides = [1, 1]} : vector<2x512xf32> to vector<2x256xf32>
    %86 = vector.broadcast %84 : f32 to vector<2x256xf32>
    %87 = arith.mulf %86, %85 : vector<2x256xf32>
    %88 = arith.addf %78, %87 : vector<2x256xf32>
    %c63 = arith.constant 63 : index
    %89 = memref.load %arg5[%c63] : memref<98xf32, #tpu.memory_space<smem>>
    %90 = vector.extract_strided_slice %59 {offsets = [0, 109], sizes = [2, 256], strides = [1, 1]} : vector<2x512xf32> to vector<2x256xf32>
    %91 = vector.broadcast %89 : f32 to vector<2x256xf32>
    %92 = arith.mulf %91, %90 : vector<2x256xf32>
    %93 = arith.addf %83, %92 : vector<2x256xf32>
    %c21 = arith.constant 21 : index
    %94 = memref.load %arg5[%c21] : memref<98xf32, #tpu.memory_space<smem>>
    %95 = vector.extract_strided_slice %57 {offsets = [0, 125], sizes = [2, 256], strides = [1, 1]} : vector<2x512xf32> to vector<2x256xf32>
    %96 = vector.broadcast %94 : f32 to vector<2x256xf32>
    %97 = arith.mulf %96, %95 : vector<2x256xf32>
    %98 = arith.addf %88, %97 : vector<2x256xf32>
    %c70 = arith.constant 70 : index
    %99 = memref.load %arg5[%c70] : memref<98xf32, #tpu.memory_space<smem>>
    %100 = vector.extract_strided_slice %59 {offsets = [0, 125], sizes = [2, 256], strides = [1, 1]} : vector<2x512xf32> to vector<2x256xf32>
    %101 = vector.broadcast %99 : f32 to vector<2x256xf32>
    %102 = arith.mulf %101, %100 : vector<2x256xf32>
    %103 = arith.addf %93, %102 : vector<2x256xf32>
    %c28 = arith.constant 28 : index
    %104 = memref.load %arg5[%c28] : memref<98xf32, #tpu.memory_space<smem>>
    %105 = vector.extract_strided_slice %57 {offsets = [0, 141], sizes = [2, 256], strides = [1, 1]} : vector<2x512xf32> to vector<2x256xf32>
    %106 = vector.broadcast %104 : f32 to vector<2x256xf32>
    %107 = arith.mulf %106, %105 : vector<2x256xf32>
    %108 = arith.addf %98, %107 : vector<2x256xf32>
    %c77 = arith.constant 77 : index
    %109 = memref.load %arg5[%c77] : memref<98xf32, #tpu.memory_space<smem>>
    %110 = vector.extract_strided_slice %59 {offsets = [0, 141], sizes = [2, 256], strides = [1, 1]} : vector<2x512xf32> to vector<2x256xf32>
    %111 = vector.broadcast %109 : f32 to vector<2x256xf32>
    %112 = arith.mulf %111, %110 : vector<2x256xf32>
    %113 = arith.addf %103, %112 : vector<2x256xf32>
    %c35 = arith.constant 35 : index
    %114 = memref.load %arg5[%c35] : memref<98xf32, #tpu.memory_space<smem>>
    %115 = vector.extract_strided_slice %57 {offsets = [0, 157], sizes = [2, 256], strides = [1, 1]} : vector<2x512xf32> to vector<2x256xf32>
    %116 = vector.broadcast %114 : f32 to vector<2x256xf32>
    %117 = arith.mulf %116, %115 : vector<2x256xf32>
    %118 = arith.addf %108, %117 : vector<2x256xf32>
    %c84 = arith.constant 84 : index
    %119 = memref.load %arg5[%c84] : memref<98xf32, #tpu.memory_space<smem>>
    %120 = vector.extract_strided_slice %59 {offsets = [0, 157], sizes = [2, 256], strides = [1, 1]} : vector<2x512xf32> to vector<2x256xf32>
    %121 = vector.broadcast %119 : f32 to vector<2x256xf32>
    %122 = arith.mulf %121, %120 : vector<2x256xf32>
    %123 = arith.addf %113, %122 : vector<2x256xf32>
    %c42 = arith.constant 42 : index
    %124 = memref.load %arg5[%c42] : memref<98xf32, #tpu.memory_space<smem>>
    %125 = vector.extract_strided_slice %57 {offsets = [0, 173], sizes = [2, 256], strides = [1, 1]} : vector<2x512xf32> to vector<2x256xf32>
    %126 = vector.broadcast %124 : f32 to vector<2x256xf32>
    %127 = arith.mulf %126, %125 : vector<2x256xf32>
    %128 = arith.addf %118, %127 : vector<2x256xf32>
    %c91 = arith.constant 91 : index
    %129 = memref.load %arg5[%c91] : memref<98xf32, #tpu.memory_space<smem>>
    %130 = vector.extract_strided_slice %59 {offsets = [0, 173], sizes = [2, 256], strides = [1, 1]} : vector<2x512xf32> to vector<2x256xf32>
    %131 = vector.broadcast %129 : f32 to vector<2x256xf32>
    %132 = arith.mulf %131, %130 : vector<2x256xf32>
    %133 = arith.addf %123, %132 : vector<2x256xf32>
    %134 = arith.addf %128, %133 : vector<2x256xf32>
    %135 = vector.extract_strided_slice %60 {offsets = [0, 0], sizes = [1, 256], strides = [1, 1]} : vector<7x256xf32> to vector<1x256xf32>
    %136 = vector.broadcast %135 : vector<1x256xf32> to vector<2x256xf32>
    %137 = arith.mulf %134, %136 : vector<2x256xf32>
    %138 = arith.addf %61, %137 : vector<2x256xf32>
    %cst_38 = arith.constant 0.000000e+00 : f32
    %139 = vector.broadcast %cst_38 : f32 to vector<2x256xf32>
    %cst_39 = arith.constant 0.000000e+00 : f32
    %140 = vector.broadcast %cst_39 : f32 to vector<2x256xf32>
    %c1_40 = arith.constant 1 : index
    %141 = memref.load %arg5[%c1_40] : memref<98xf32, #tpu.memory_space<smem>>
    %142 = vector.extract_strided_slice %57 {offsets = [0, 78], sizes = [2, 256], strides = [1, 1]} : vector<2x512xf32> to vector<2x256xf32>
    %143 = vector.broadcast %141 : f32 to vector<2x256xf32>
    %144 = arith.mulf %143, %142 : vector<2x256xf32>
    %145 = arith.addf %139, %144 : vector<2x256xf32>
    %c50 = arith.constant 50 : index
    %146 = memref.load %arg5[%c50] : memref<98xf32, #tpu.memory_space<smem>>
    %147 = vector.extract_strided_slice %59 {offsets = [0, 78], sizes = [2, 256], strides = [1, 1]} : vector<2x512xf32> to vector<2x256xf32>
    %148 = vector.broadcast %146 : f32 to vector<2x256xf32>
    %149 = arith.mulf %148, %147 : vector<2x256xf32>
    %150 = arith.addf %140, %149 : vector<2x256xf32>
    %c8 = arith.constant 8 : index
    %151 = memref.load %arg5[%c8] : memref<98xf32, #tpu.memory_space<smem>>
    %152 = vector.extract_strided_slice %57 {offsets = [0, 94], sizes = [2, 256], strides = [1, 1]} : vector<2x512xf32> to vector<2x256xf32>
    %153 = vector.broadcast %151 : f32 to vector<2x256xf32>
    %154 = arith.mulf %153, %152 : vector<2x256xf32>
    %155 = arith.addf %145, %154 : vector<2x256xf32>
    %c57 = arith.constant 57 : index
    %156 = memref.load %arg5[%c57] : memref<98xf32, #tpu.memory_space<smem>>
    %157 = vector.extract_strided_slice %59 {offsets = [0, 94], sizes = [2, 256], strides = [1, 1]} : vector<2x512xf32> to vector<2x256xf32>
    %158 = vector.broadcast %156 : f32 to vector<2x256xf32>
    %159 = arith.mulf %158, %157 : vector<2x256xf32>
    %160 = arith.addf %150, %159 : vector<2x256xf32>
    %c15 = arith.constant 15 : index
    %161 = memref.load %arg5[%c15] : memref<98xf32, #tpu.memory_space<smem>>
    %162 = vector.extract_strided_slice %57 {offsets = [0, 110], sizes = [2, 256], strides = [1, 1]} : vector<2x512xf32> to vector<2x256xf32>
    %163 = vector.broadcast %161 : f32 to vector<2x256xf32>
    %164 = arith.mulf %163, %162 : vector<2x256xf32>
    %165 = arith.addf %155, %164 : vector<2x256xf32>
    %c64 = arith.constant 64 : index
    %166 = memref.load %arg5[%c64] : memref<98xf32, #tpu.memory_space<smem>>
    %167 = vector.extract_strided_slice %59 {offsets = [0, 110], sizes = [2, 256], strides = [1, 1]} : vector<2x512xf32> to vector<2x256xf32>
    %168 = vector.broadcast %166 : f32 to vector<2x256xf32>
    %169 = arith.mulf %168, %167 : vector<2x256xf32>
    %170 = arith.addf %160, %169 : vector<2x256xf32>
    %c22 = arith.constant 22 : index
    %171 = memref.load %arg5[%c22] : memref<98xf32, #tpu.memory_space<smem>>
    %172 = vector.extract_strided_slice %57 {offsets = [0, 126], sizes = [2, 256], strides = [1, 1]} : vector<2x512xf32> to vector<2x256xf32>
    %173 = vector.broadcast %171 : f32 to vector<2x256xf32>
    %174 = arith.mulf %173, %172 : vector<2x256xf32>
    %175 = arith.addf %165, %174 : vector<2x256xf32>
    %c71 = arith.constant 71 : index
    %176 = memref.load %arg5[%c71] : memref<98xf32, #tpu.memory_space<smem>>
    %177 = vector.extract_strided_slice %59 {offsets = [0, 126], sizes = [2, 256], strides = [1, 1]} : vector<2x512xf32> to vector<2x256xf32>
    %178 = vector.broadcast %176 : f32 to vector<2x256xf32>
    %179 = arith.mulf %178, %177 : vector<2x256xf32>
    %180 = arith.addf %170, %179 : vector<2x256xf32>
    %c29 = arith.constant 29 : index
    %181 = memref.load %arg5[%c29] : memref<98xf32, #tpu.memory_space<smem>>
    %182 = vector.extract_strided_slice %57 {offsets = [0, 142], sizes = [2, 256], strides = [1, 1]} : vector<2x512xf32> to vector<2x256xf32>
    %183 = vector.broadcast %181 : f32 to vector<2x256xf32>
    %184 = arith.mulf %183, %182 : vector<2x256xf32>
    %185 = arith.addf %175, %184 : vector<2x256xf32>
    %c78 = arith.constant 78 : index
    %186 = memref.load %arg5[%c78] : memref<98xf32, #tpu.memory_space<smem>>
    %187 = vector.extract_strided_slice %59 {offsets = [0, 142], sizes = [2, 256], strides = [1, 1]} : vector<2x512xf32> to vector<2x256xf32>
    %188 = vector.broadcast %186 : f32 to vector<2x256xf32>
    %189 = arith.mulf %188, %187 : vector<2x256xf32>
    %190 = arith.addf %180, %189 : vector<2x256xf32>
    %c36 = arith.constant 36 : index
    %191 = memref.load %arg5[%c36] : memref<98xf32, #tpu.memory_space<smem>>
    %192 = vector.extract_strided_slice %57 {offsets = [0, 158], sizes = [2, 256], strides = [1, 1]} : vector<2x512xf32> to vector<2x256xf32>
    %193 = vector.broadcast %191 : f32 to vector<2x256xf32>
    %194 = arith.mulf %193, %192 : vector<2x256xf32>
    %195 = arith.addf %185, %194 : vector<2x256xf32>
    %c85 = arith.constant 85 : index
    %196 = memref.load %arg5[%c85] : memref<98xf32, #tpu.memory_space<smem>>
    %197 = vector.extract_strided_slice %59 {offsets = [0, 158], sizes = [2, 256], strides = [1, 1]} : vector<2x512xf32> to vector<2x256xf32>
    %198 = vector.broadcast %196 : f32 to vector<2x256xf32>
    %199 = arith.mulf %198, %197 : vector<2x256xf32>
    %200 = arith.addf %190, %199 : vector<2x256xf32>
    %c43 = arith.constant 43 : index
    %201 = memref.load %arg5[%c43] : memref<98xf32, #tpu.memory_space<smem>>
    %202 = vector.extract_strided_slice %57 {offsets = [0, 174], sizes = [2, 256], strides = [1, 1]} : vector<2x512xf32> to vector<2x256xf32>
    %203 = vector.broadcast %201 : f32 to vector<2x256xf32>
    %204 = arith.mulf %203, %202 : vector<2x256xf32>
    %205 = arith.addf %195, %204 : vector<2x256xf32>
    %c92 = arith.constant 92 : index
    %206 = memref.load %arg5[%c92] : memref<98xf32, #tpu.memory_space<smem>>
    %207 = vector.extract_strided_slice %59 {offsets = [0, 174], sizes = [2, 256], strides = [1, 1]} : vector<2x512xf32> to vector<2x256xf32>
    %208 = vector.broadcast %206 : f32 to vector<2x256xf32>
    %209 = arith.mulf %208, %207 : vector<2x256xf32>
    %210 = arith.addf %200, %209 : vector<2x256xf32>
    %211 = arith.addf %205, %210 : vector<2x256xf32>
    %212 = vector.extract_strided_slice %60 {offsets = [1, 0], sizes = [1, 256], strides = [1, 1]} : vector<7x256xf32> to vector<1x256xf32>
    %213 = vector.broadcast %212 : vector<1x256xf32> to vector<2x256xf32>
    %214 = arith.mulf %211, %213 : vector<2x256xf32>
    %215 = arith.addf %138, %214 : vector<2x256xf32>
    %cst_41 = arith.constant 0.000000e+00 : f32
    %216 = vector.broadcast %cst_41 : f32 to vector<2x256xf32>
    %cst_42 = arith.constant 0.000000e+00 : f32
    %217 = vector.broadcast %cst_42 : f32 to vector<2x256xf32>
    %c2 = arith.constant 2 : index
    %218 = memref.load %arg5[%c2] : memref<98xf32, #tpu.memory_space<smem>>
    %219 = vector.extract_strided_slice %57 {offsets = [0, 79], sizes = [2, 256], strides = [1, 1]} : vector<2x512xf32> to vector<2x256xf32>
    %220 = vector.broadcast %218 : f32 to vector<2x256xf32>
    %221 = arith.mulf %220, %219 : vector<2x256xf32>
    %222 = arith.addf %216, %221 : vector<2x256xf32>
    %c51 = arith.constant 51 : index
    %223 = memref.load %arg5[%c51] : memref<98xf32, #tpu.memory_space<smem>>
    %224 = vector.extract_strided_slice %59 {offsets = [0, 79], sizes = [2, 256], strides = [1, 1]} : vector<2x512xf32> to vector<2x256xf32>
    %225 = vector.broadcast %223 : f32 to vector<2x256xf32>
    %226 = arith.mulf %225, %224 : vector<2x256xf32>
    %227 = arith.addf %217, %226 : vector<2x256xf32>
    %c9 = arith.constant 9 : index
    %228 = memref.load %arg5[%c9] : memref<98xf32, #tpu.memory_space<smem>>
    %229 = vector.extract_strided_slice %57 {offsets = [0, 95], sizes = [2, 256], strides = [1, 1]} : vector<2x512xf32> to vector<2x256xf32>
    %230 = vector.broadcast %228 : f32 to vector<2x256xf32>
    %231 = arith.mulf %230, %229 : vector<2x256xf32>
    %232 = arith.addf %222, %231 : vector<2x256xf32>
    %c58 = arith.constant 58 : index
    %233 = memref.load %arg5[%c58] : memref<98xf32, #tpu.memory_space<smem>>
    %234 = vector.extract_strided_slice %59 {offsets = [0, 95], sizes = [2, 256], strides = [1, 1]} : vector<2x512xf32> to vector<2x256xf32>
    %235 = vector.broadcast %233 : f32 to vector<2x256xf32>
    %236 = arith.mulf %235, %234 : vector<2x256xf32>
    %237 = arith.addf %227, %236 : vector<2x256xf32>
    %c16 = arith.constant 16 : index
    %238 = memref.load %arg5[%c16] : memref<98xf32, #tpu.memory_space<smem>>
    %239 = vector.extract_strided_slice %57 {offsets = [0, 111], sizes = [2, 256], strides = [1, 1]} : vector<2x512xf32> to vector<2x256xf32>
    %240 = vector.broadcast %238 : f32 to vector<2x256xf32>
    %241 = arith.mulf %240, %239 : vector<2x256xf32>
    %242 = arith.addf %232, %241 : vector<2x256xf32>
    %c65 = arith.constant 65 : index
    %243 = memref.load %arg5[%c65] : memref<98xf32, #tpu.memory_space<smem>>
    %244 = vector.extract_strided_slice %59 {offsets = [0, 111], sizes = [2, 256], strides = [1, 1]} : vector<2x512xf32> to vector<2x256xf32>
    %245 = vector.broadcast %243 : f32 to vector<2x256xf32>
    %246 = arith.mulf %245, %244 : vector<2x256xf32>
    %247 = arith.addf %237, %246 : vector<2x256xf32>
    %c23 = arith.constant 23 : index
    %248 = memref.load %arg5[%c23] : memref<98xf32, #tpu.memory_space<smem>>
    %249 = vector.extract_strided_slice %57 {offsets = [0, 127], sizes = [2, 256], strides = [1, 1]} : vector<2x512xf32> to vector<2x256xf32>
    %250 = vector.broadcast %248 : f32 to vector<2x256xf32>
    %251 = arith.mulf %250, %249 : vector<2x256xf32>
    %252 = arith.addf %242, %251 : vector<2x256xf32>
    %c72 = arith.constant 72 : index
    %253 = memref.load %arg5[%c72] : memref<98xf32, #tpu.memory_space<smem>>
    %254 = vector.extract_strided_slice %59 {offsets = [0, 127], sizes = [2, 256], strides = [1, 1]} : vector<2x512xf32> to vector<2x256xf32>
    %255 = vector.broadcast %253 : f32 to vector<2x256xf32>
    %256 = arith.mulf %255, %254 : vector<2x256xf32>
    %257 = arith.addf %247, %256 : vector<2x256xf32>
    %c30 = arith.constant 30 : index
    %258 = memref.load %arg5[%c30] : memref<98xf32, #tpu.memory_space<smem>>
    %259 = vector.extract_strided_slice %57 {offsets = [0, 143], sizes = [2, 256], strides = [1, 1]} : vector<2x512xf32> to vector<2x256xf32>
    %260 = vector.broadcast %258 : f32 to vector<2x256xf32>
    %261 = arith.mulf %260, %259 : vector<2x256xf32>
    %262 = arith.addf %252, %261 : vector<2x256xf32>
    %c79 = arith.constant 79 : index
    %263 = memref.load %arg5[%c79] : memref<98xf32, #tpu.memory_space<smem>>
    %264 = vector.extract_strided_slice %59 {offsets = [0, 143], sizes = [2, 256], strides = [1, 1]} : vector<2x512xf32> to vector<2x256xf32>
    %265 = vector.broadcast %263 : f32 to vector<2x256xf32>
    %266 = arith.mulf %265, %264 : vector<2x256xf32>
    %267 = arith.addf %257, %266 : vector<2x256xf32>
    %c37 = arith.constant 37 : index
    %268 = memref.load %arg5[%c37] : memref<98xf32, #tpu.memory_space<smem>>
    %269 = vector.extract_strided_slice %57 {offsets = [0, 159], sizes = [2, 256], strides = [1, 1]} : vector<2x512xf32> to vector<2x256xf32>
    %270 = vector.broadcast %268 : f32 to vector<2x256xf32>
    %271 = arith.mulf %270, %269 : vector<2x256xf32>
    %272 = arith.addf %262, %271 : vector<2x256xf32>
    %c86 = arith.constant 86 : index
    %273 = memref.load %arg5[%c86] : memref<98xf32, #tpu.memory_space<smem>>
    %274 = vector.extract_strided_slice %59 {offsets = [0, 159], sizes = [2, 256], strides = [1, 1]} : vector<2x512xf32> to vector<2x256xf32>
    %275 = vector.broadcast %273 : f32 to vector<2x256xf32>
    %276 = arith.mulf %275, %274 : vector<2x256xf32>
    %277 = arith.addf %267, %276 : vector<2x256xf32>
    %c44 = arith.constant 44 : index
    %278 = memref.load %arg5[%c44] : memref<98xf32, #tpu.memory_space<smem>>
    %279 = vector.extract_strided_slice %57 {offsets = [0, 175], sizes = [2, 256], strides = [1, 1]} : vector<2x512xf32> to vector<2x256xf32>
    %280 = vector.broadcast %278 : f32 to vector<2x256xf32>
    %281 = arith.mulf %280, %279 : vector<2x256xf32>
    %282 = arith.addf %272, %281 : vector<2x256xf32>
    %c93 = arith.constant 93 : index
    %283 = memref.load %arg5[%c93] : memref<98xf32, #tpu.memory_space<smem>>
    %284 = vector.extract_strided_slice %59 {offsets = [0, 175], sizes = [2, 256], strides = [1, 1]} : vector<2x512xf32> to vector<2x256xf32>
    %285 = vector.broadcast %283 : f32 to vector<2x256xf32>
    %286 = arith.mulf %285, %284 : vector<2x256xf32>
    %287 = arith.addf %277, %286 : vector<2x256xf32>
    %288 = arith.addf %282, %287 : vector<2x256xf32>
    %289 = vector.extract_strided_slice %60 {offsets = [2, 0], sizes = [1, 256], strides = [1, 1]} : vector<7x256xf32> to vector<1x256xf32>
    %290 = vector.broadcast %289 : vector<1x256xf32> to vector<2x256xf32>
    %291 = arith.mulf %288, %290 : vector<2x256xf32>
    %292 = arith.addf %215, %291 : vector<2x256xf32>
    %cst_43 = arith.constant 0.000000e+00 : f32
    %293 = vector.broadcast %cst_43 : f32 to vector<2x256xf32>
    %cst_44 = arith.constant 0.000000e+00 : f32
    %294 = vector.broadcast %cst_44 : f32 to vector<2x256xf32>
    %c3 = arith.constant 3 : index
    %295 = memref.load %arg5[%c3] : memref<98xf32, #tpu.memory_space<smem>>
    %296 = vector.extract_strided_slice %57 {offsets = [0, 80], sizes = [2, 256], strides = [1, 1]} : vector<2x512xf32> to vector<2x256xf32>
    %297 = vector.broadcast %295 : f32 to vector<2x256xf32>
    %298 = arith.mulf %297, %296 : vector<2x256xf32>
    %299 = arith.addf %293, %298 : vector<2x256xf32>
    %c52 = arith.constant 52 : index
    %300 = memref.load %arg5[%c52] : memref<98xf32, #tpu.memory_space<smem>>
    %301 = vector.extract_strided_slice %59 {offsets = [0, 80], sizes = [2, 256], strides = [1, 1]} : vector<2x512xf32> to vector<2x256xf32>
    %302 = vector.broadcast %300 : f32 to vector<2x256xf32>
    %303 = arith.mulf %302, %301 : vector<2x256xf32>
    %304 = arith.addf %294, %303 : vector<2x256xf32>
    %c10 = arith.constant 10 : index
    %305 = memref.load %arg5[%c10] : memref<98xf32, #tpu.memory_space<smem>>
    %306 = vector.extract_strided_slice %57 {offsets = [0, 96], sizes = [2, 256], strides = [1, 1]} : vector<2x512xf32> to vector<2x256xf32>
    %307 = vector.broadcast %305 : f32 to vector<2x256xf32>
    %308 = arith.mulf %307, %306 : vector<2x256xf32>
    %309 = arith.addf %299, %308 : vector<2x256xf32>
    %c59 = arith.constant 59 : index
    %310 = memref.load %arg5[%c59] : memref<98xf32, #tpu.memory_space<smem>>
    %311 = vector.extract_strided_slice %59 {offsets = [0, 96], sizes = [2, 256], strides = [1, 1]} : vector<2x512xf32> to vector<2x256xf32>
    %312 = vector.broadcast %310 : f32 to vector<2x256xf32>
    %313 = arith.mulf %312, %311 : vector<2x256xf32>
    %314 = arith.addf %304, %313 : vector<2x256xf32>
    %c17 = arith.constant 17 : index
    %315 = memref.load %arg5[%c17] : memref<98xf32, #tpu.memory_space<smem>>
    %316 = vector.extract_strided_slice %57 {offsets = [0, 112], sizes = [2, 256], strides = [1, 1]} : vector<2x512xf32> to vector<2x256xf32>
    %317 = vector.broadcast %315 : f32 to vector<2x256xf32>
    %318 = arith.mulf %317, %316 : vector<2x256xf32>
    %319 = arith.addf %309, %318 : vector<2x256xf32>
    %c66 = arith.constant 66 : index
    %320 = memref.load %arg5[%c66] : memref<98xf32, #tpu.memory_space<smem>>
    %321 = vector.extract_strided_slice %59 {offsets = [0, 112], sizes = [2, 256], strides = [1, 1]} : vector<2x512xf32> to vector<2x256xf32>
    %322 = vector.broadcast %320 : f32 to vector<2x256xf32>
    %323 = arith.mulf %322, %321 : vector<2x256xf32>
    %324 = arith.addf %314, %323 : vector<2x256xf32>
    %c24 = arith.constant 24 : index
    %325 = memref.load %arg5[%c24] : memref<98xf32, #tpu.memory_space<smem>>
    %326 = vector.extract_strided_slice %57 {offsets = [0, 128], sizes = [2, 256], strides = [1, 1]} : vector<2x512xf32> to vector<2x256xf32>
    %327 = vector.broadcast %325 : f32 to vector<2x256xf32>
    %328 = arith.mulf %327, %326 : vector<2x256xf32>
    %329 = arith.addf %319, %328 : vector<2x256xf32>
    %c73 = arith.constant 73 : index
    %330 = memref.load %arg5[%c73] : memref<98xf32, #tpu.memory_space<smem>>
    %331 = vector.extract_strided_slice %59 {offsets = [0, 128], sizes = [2, 256], strides = [1, 1]} : vector<2x512xf32> to vector<2x256xf32>
    %332 = vector.broadcast %330 : f32 to vector<2x256xf32>
    %333 = arith.mulf %332, %331 : vector<2x256xf32>
    %334 = arith.addf %324, %333 : vector<2x256xf32>
    %c31 = arith.constant 31 : index
    %335 = memref.load %arg5[%c31] : memref<98xf32, #tpu.memory_space<smem>>
    %336 = vector.extract_strided_slice %57 {offsets = [0, 144], sizes = [2, 256], strides = [1, 1]} : vector<2x512xf32> to vector<2x256xf32>
    %337 = vector.broadcast %335 : f32 to vector<2x256xf32>
    %338 = arith.mulf %337, %336 : vector<2x256xf32>
    %339 = arith.addf %329, %338 : vector<2x256xf32>
    %c80 = arith.constant 80 : index
    %340 = memref.load %arg5[%c80] : memref<98xf32, #tpu.memory_space<smem>>
    %341 = vector.extract_strided_slice %59 {offsets = [0, 144], sizes = [2, 256], strides = [1, 1]} : vector<2x512xf32> to vector<2x256xf32>
    %342 = vector.broadcast %340 : f32 to vector<2x256xf32>
    %343 = arith.mulf %342, %341 : vector<2x256xf32>
    %344 = arith.addf %334, %343 : vector<2x256xf32>
    %c38 = arith.constant 38 : index
    %345 = memref.load %arg5[%c38] : memref<98xf32, #tpu.memory_space<smem>>
    %346 = vector.extract_strided_slice %57 {offsets = [0, 160], sizes = [2, 256], strides = [1, 1]} : vector<2x512xf32> to vector<2x256xf32>
    %347 = vector.broadcast %345 : f32 to vector<2x256xf32>
    %348 = arith.mulf %347, %346 : vector<2x256xf32>
    %349 = arith.addf %339, %348 : vector<2x256xf32>
    %c87 = arith.constant 87 : index
    %350 = memref.load %arg5[%c87] : memref<98xf32, #tpu.memory_space<smem>>
    %351 = vector.extract_strided_slice %59 {offsets = [0, 160], sizes = [2, 256], strides = [1, 1]} : vector<2x512xf32> to vector<2x256xf32>
    %352 = vector.broadcast %350 : f32 to vector<2x256xf32>
    %353 = arith.mulf %352, %351 : vector<2x256xf32>
    %354 = arith.addf %344, %353 : vector<2x256xf32>
    %c45 = arith.constant 45 : index
    %355 = memref.load %arg5[%c45] : memref<98xf32, #tpu.memory_space<smem>>
    %356 = vector.extract_strided_slice %57 {offsets = [0, 176], sizes = [2, 256], strides = [1, 1]} : vector<2x512xf32> to vector<2x256xf32>
    %357 = vector.broadcast %355 : f32 to vector<2x256xf32>
    %358 = arith.mulf %357, %356 : vector<2x256xf32>
    %359 = arith.addf %349, %358 : vector<2x256xf32>
    %c94 = arith.constant 94 : index
    %360 = memref.load %arg5[%c94] : memref<98xf32, #tpu.memory_space<smem>>
    %361 = vector.extract_strided_slice %59 {offsets = [0, 176], sizes = [2, 256], strides = [1, 1]} : vector<2x512xf32> to vector<2x256xf32>
    %362 = vector.broadcast %360 : f32 to vector<2x256xf32>
    %363 = arith.mulf %362, %361 : vector<2x256xf32>
    %364 = arith.addf %354, %363 : vector<2x256xf32>
    %365 = arith.addf %359, %364 : vector<2x256xf32>
    %366 = vector.extract_strided_slice %60 {offsets = [3, 0], sizes = [1, 256], strides = [1, 1]} : vector<7x256xf32> to vector<1x256xf32>
    %367 = vector.broadcast %366 : vector<1x256xf32> to vector<2x256xf32>
    %368 = arith.mulf %365, %367 : vector<2x256xf32>
    %369 = arith.addf %292, %368 : vector<2x256xf32>
    %cst_45 = arith.constant 0.000000e+00 : f32
    %370 = vector.broadcast %cst_45 : f32 to vector<2x256xf32>
    %cst_46 = arith.constant 0.000000e+00 : f32
    %371 = vector.broadcast %cst_46 : f32 to vector<2x256xf32>
    %c4 = arith.constant 4 : index
    %372 = memref.load %arg5[%c4] : memref<98xf32, #tpu.memory_space<smem>>
    %373 = vector.extract_strided_slice %57 {offsets = [0, 81], sizes = [2, 256], strides = [1, 1]} : vector<2x512xf32> to vector<2x256xf32>
    %374 = vector.broadcast %372 : f32 to vector<2x256xf32>
    %375 = arith.mulf %374, %373 : vector<2x256xf32>
    %376 = arith.addf %370, %375 : vector<2x256xf32>
    %c53 = arith.constant 53 : index
    %377 = memref.load %arg5[%c53] : memref<98xf32, #tpu.memory_space<smem>>
    %378 = vector.extract_strided_slice %59 {offsets = [0, 81], sizes = [2, 256], strides = [1, 1]} : vector<2x512xf32> to vector<2x256xf32>
    %379 = vector.broadcast %377 : f32 to vector<2x256xf32>
    %380 = arith.mulf %379, %378 : vector<2x256xf32>
    %381 = arith.addf %371, %380 : vector<2x256xf32>
    %c11 = arith.constant 11 : index
    %382 = memref.load %arg5[%c11] : memref<98xf32, #tpu.memory_space<smem>>
    %383 = vector.extract_strided_slice %57 {offsets = [0, 97], sizes = [2, 256], strides = [1, 1]} : vector<2x512xf32> to vector<2x256xf32>
    %384 = vector.broadcast %382 : f32 to vector<2x256xf32>
    %385 = arith.mulf %384, %383 : vector<2x256xf32>
    %386 = arith.addf %376, %385 : vector<2x256xf32>
    %c60 = arith.constant 60 : index
    %387 = memref.load %arg5[%c60] : memref<98xf32, #tpu.memory_space<smem>>
    %388 = vector.extract_strided_slice %59 {offsets = [0, 97], sizes = [2, 256], strides = [1, 1]} : vector<2x512xf32> to vector<2x256xf32>
    %389 = vector.broadcast %387 : f32 to vector<2x256xf32>
    %390 = arith.mulf %389, %388 : vector<2x256xf32>
    %391 = arith.addf %381, %390 : vector<2x256xf32>
    %c18 = arith.constant 18 : index
    %392 = memref.load %arg5[%c18] : memref<98xf32, #tpu.memory_space<smem>>
    %393 = vector.extract_strided_slice %57 {offsets = [0, 113], sizes = [2, 256], strides = [1, 1]} : vector<2x512xf32> to vector<2x256xf32>
    %394 = vector.broadcast %392 : f32 to vector<2x256xf32>
    %395 = arith.mulf %394, %393 : vector<2x256xf32>
    %396 = arith.addf %386, %395 : vector<2x256xf32>
    %c67 = arith.constant 67 : index
    %397 = memref.load %arg5[%c67] : memref<98xf32, #tpu.memory_space<smem>>
    %398 = vector.extract_strided_slice %59 {offsets = [0, 113], sizes = [2, 256], strides = [1, 1]} : vector<2x512xf32> to vector<2x256xf32>
    %399 = vector.broadcast %397 : f32 to vector<2x256xf32>
    %400 = arith.mulf %399, %398 : vector<2x256xf32>
    %401 = arith.addf %391, %400 : vector<2x256xf32>
    %c25 = arith.constant 25 : index
    %402 = memref.load %arg5[%c25] : memref<98xf32, #tpu.memory_space<smem>>
    %403 = vector.extract_strided_slice %57 {offsets = [0, 129], sizes = [2, 256], strides = [1, 1]} : vector<2x512xf32> to vector<2x256xf32>
    %404 = vector.broadcast %402 : f32 to vector<2x256xf32>
    %405 = arith.mulf %404, %403 : vector<2x256xf32>
    %406 = arith.addf %396, %405 : vector<2x256xf32>
    %c74 = arith.constant 74 : index
    %407 = memref.load %arg5[%c74] : memref<98xf32, #tpu.memory_space<smem>>
    %408 = vector.extract_strided_slice %59 {offsets = [0, 129], sizes = [2, 256], strides = [1, 1]} : vector<2x512xf32> to vector<2x256xf32>
    %409 = vector.broadcast %407 : f32 to vector<2x256xf32>
    %410 = arith.mulf %409, %408 : vector<2x256xf32>
    %411 = arith.addf %401, %410 : vector<2x256xf32>
    %c32 = arith.constant 32 : index
    %412 = memref.load %arg5[%c32] : memref<98xf32, #tpu.memory_space<smem>>
    %413 = vector.extract_strided_slice %57 {offsets = [0, 145], sizes = [2, 256], strides = [1, 1]} : vector<2x512xf32> to vector<2x256xf32>
    %414 = vector.broadcast %412 : f32 to vector<2x256xf32>
    %415 = arith.mulf %414, %413 : vector<2x256xf32>
    %416 = arith.addf %406, %415 : vector<2x256xf32>
    %c81 = arith.constant 81 : index
    %417 = memref.load %arg5[%c81] : memref<98xf32, #tpu.memory_space<smem>>
    %418 = vector.extract_strided_slice %59 {offsets = [0, 145], sizes = [2, 256], strides = [1, 1]} : vector<2x512xf32> to vector<2x256xf32>
    %419 = vector.broadcast %417 : f32 to vector<2x256xf32>
    %420 = arith.mulf %419, %418 : vector<2x256xf32>
    %421 = arith.addf %411, %420 : vector<2x256xf32>
    %c39 = arith.constant 39 : index
    %422 = memref.load %arg5[%c39] : memref<98xf32, #tpu.memory_space<smem>>
    %423 = vector.extract_strided_slice %57 {offsets = [0, 161], sizes = [2, 256], strides = [1, 1]} : vector<2x512xf32> to vector<2x256xf32>
    %424 = vector.broadcast %422 : f32 to vector<2x256xf32>
    %425 = arith.mulf %424, %423 : vector<2x256xf32>
    %426 = arith.addf %416, %425 : vector<2x256xf32>
    %c88 = arith.constant 88 : index
    %427 = memref.load %arg5[%c88] : memref<98xf32, #tpu.memory_space<smem>>
    %428 = vector.extract_strided_slice %59 {offsets = [0, 161], sizes = [2, 256], strides = [1, 1]} : vector<2x512xf32> to vector<2x256xf32>
    %429 = vector.broadcast %427 : f32 to vector<2x256xf32>
    %430 = arith.mulf %429, %428 : vector<2x256xf32>
    %431 = arith.addf %421, %430 : vector<2x256xf32>
    %c46 = arith.constant 46 : index
    %432 = memref.load %arg5[%c46] : memref<98xf32, #tpu.memory_space<smem>>
    %433 = vector.extract_strided_slice %57 {offsets = [0, 177], sizes = [2, 256], strides = [1, 1]} : vector<2x512xf32> to vector<2x256xf32>
    %434 = vector.broadcast %432 : f32 to vector<2x256xf32>
    %435 = arith.mulf %434, %433 : vector<2x256xf32>
    %436 = arith.addf %426, %435 : vector<2x256xf32>
    %c95 = arith.constant 95 : index
    %437 = memref.load %arg5[%c95] : memref<98xf32, #tpu.memory_space<smem>>
    %438 = vector.extract_strided_slice %59 {offsets = [0, 177], sizes = [2, 256], strides = [1, 1]} : vector<2x512xf32> to vector<2x256xf32>
    %439 = vector.broadcast %437 : f32 to vector<2x256xf32>
    %440 = arith.mulf %439, %438 : vector<2x256xf32>
    %441 = arith.addf %431, %440 : vector<2x256xf32>
    %442 = arith.addf %436, %441 : vector<2x256xf32>
    %443 = vector.extract_strided_slice %60 {offsets = [4, 0], sizes = [1, 256], strides = [1, 1]} : vector<7x256xf32> to vector<1x256xf32>
    %444 = vector.broadcast %443 : vector<1x256xf32> to vector<2x256xf32>
    %445 = arith.mulf %442, %444 : vector<2x256xf32>
    %446 = arith.addf %369, %445 : vector<2x256xf32>
    %cst_47 = arith.constant 0.000000e+00 : f32
    %447 = vector.broadcast %cst_47 : f32 to vector<2x256xf32>
    %cst_48 = arith.constant 0.000000e+00 : f32
    %448 = vector.broadcast %cst_48 : f32 to vector<2x256xf32>
    %c5 = arith.constant 5 : index
    %449 = memref.load %arg5[%c5] : memref<98xf32, #tpu.memory_space<smem>>
    %450 = vector.extract_strided_slice %57 {offsets = [0, 82], sizes = [2, 256], strides = [1, 1]} : vector<2x512xf32> to vector<2x256xf32>
    %451 = vector.broadcast %449 : f32 to vector<2x256xf32>
    %452 = arith.mulf %451, %450 : vector<2x256xf32>
    %453 = arith.addf %447, %452 : vector<2x256xf32>
    %c54 = arith.constant 54 : index
    %454 = memref.load %arg5[%c54] : memref<98xf32, #tpu.memory_space<smem>>
    %455 = vector.extract_strided_slice %59 {offsets = [0, 82], sizes = [2, 256], strides = [1, 1]} : vector<2x512xf32> to vector<2x256xf32>
    %456 = vector.broadcast %454 : f32 to vector<2x256xf32>
    %457 = arith.mulf %456, %455 : vector<2x256xf32>
    %458 = arith.addf %448, %457 : vector<2x256xf32>
    %c12 = arith.constant 12 : index
    %459 = memref.load %arg5[%c12] : memref<98xf32, #tpu.memory_space<smem>>
    %460 = vector.extract_strided_slice %57 {offsets = [0, 98], sizes = [2, 256], strides = [1, 1]} : vector<2x512xf32> to vector<2x256xf32>
    %461 = vector.broadcast %459 : f32 to vector<2x256xf32>
    %462 = arith.mulf %461, %460 : vector<2x256xf32>
    %463 = arith.addf %453, %462 : vector<2x256xf32>
    %c61 = arith.constant 61 : index
    %464 = memref.load %arg5[%c61] : memref<98xf32, #tpu.memory_space<smem>>
    %465 = vector.extract_strided_slice %59 {offsets = [0, 98], sizes = [2, 256], strides = [1, 1]} : vector<2x512xf32> to vector<2x256xf32>
    %466 = vector.broadcast %464 : f32 to vector<2x256xf32>
    %467 = arith.mulf %466, %465 : vector<2x256xf32>
    %468 = arith.addf %458, %467 : vector<2x256xf32>
    %c19 = arith.constant 19 : index
    %469 = memref.load %arg5[%c19] : memref<98xf32, #tpu.memory_space<smem>>
    %470 = vector.extract_strided_slice %57 {offsets = [0, 114], sizes = [2, 256], strides = [1, 1]} : vector<2x512xf32> to vector<2x256xf32>
    %471 = vector.broadcast %469 : f32 to vector<2x256xf32>
    %472 = arith.mulf %471, %470 : vector<2x256xf32>
    %473 = arith.addf %463, %472 : vector<2x256xf32>
    %c68 = arith.constant 68 : index
    %474 = memref.load %arg5[%c68] : memref<98xf32, #tpu.memory_space<smem>>
    %475 = vector.extract_strided_slice %59 {offsets = [0, 114], sizes = [2, 256], strides = [1, 1]} : vector<2x512xf32> to vector<2x256xf32>
    %476 = vector.broadcast %474 : f32 to vector<2x256xf32>
    %477 = arith.mulf %476, %475 : vector<2x256xf32>
    %478 = arith.addf %468, %477 : vector<2x256xf32>
    %c26 = arith.constant 26 : index
    %479 = memref.load %arg5[%c26] : memref<98xf32, #tpu.memory_space<smem>>
    %480 = vector.extract_strided_slice %57 {offsets = [0, 130], sizes = [2, 256], strides = [1, 1]} : vector<2x512xf32> to vector<2x256xf32>
    %481 = vector.broadcast %479 : f32 to vector<2x256xf32>
    %482 = arith.mulf %481, %480 : vector<2x256xf32>
    %483 = arith.addf %473, %482 : vector<2x256xf32>
    %c75 = arith.constant 75 : index
    %484 = memref.load %arg5[%c75] : memref<98xf32, #tpu.memory_space<smem>>
    %485 = vector.extract_strided_slice %59 {offsets = [0, 130], sizes = [2, 256], strides = [1, 1]} : vector<2x512xf32> to vector<2x256xf32>
    %486 = vector.broadcast %484 : f32 to vector<2x256xf32>
    %487 = arith.mulf %486, %485 : vector<2x256xf32>
    %488 = arith.addf %478, %487 : vector<2x256xf32>
    %c33 = arith.constant 33 : index
    %489 = memref.load %arg5[%c33] : memref<98xf32, #tpu.memory_space<smem>>
    %490 = vector.extract_strided_slice %57 {offsets = [0, 146], sizes = [2, 256], strides = [1, 1]} : vector<2x512xf32> to vector<2x256xf32>
    %491 = vector.broadcast %489 : f32 to vector<2x256xf32>
    %492 = arith.mulf %491, %490 : vector<2x256xf32>
    %493 = arith.addf %483, %492 : vector<2x256xf32>
    %c82 = arith.constant 82 : index
    %494 = memref.load %arg5[%c82] : memref<98xf32, #tpu.memory_space<smem>>
    %495 = vector.extract_strided_slice %59 {offsets = [0, 146], sizes = [2, 256], strides = [1, 1]} : vector<2x512xf32> to vector<2x256xf32>
    %496 = vector.broadcast %494 : f32 to vector<2x256xf32>
    %497 = arith.mulf %496, %495 : vector<2x256xf32>
    %498 = arith.addf %488, %497 : vector<2x256xf32>
    %c40 = arith.constant 40 : index
    %499 = memref.load %arg5[%c40] : memref<98xf32, #tpu.memory_space<smem>>
    %500 = vector.extract_strided_slice %57 {offsets = [0, 162], sizes = [2, 256], strides = [1, 1]} : vector<2x512xf32> to vector<2x256xf32>
    %501 = vector.broadcast %499 : f32 to vector<2x256xf32>
    %502 = arith.mulf %501, %500 : vector<2x256xf32>
    %503 = arith.addf %493, %502 : vector<2x256xf32>
    %c89 = arith.constant 89 : index
    %504 = memref.load %arg5[%c89] : memref<98xf32, #tpu.memory_space<smem>>
    %505 = vector.extract_strided_slice %59 {offsets = [0, 162], sizes = [2, 256], strides = [1, 1]} : vector<2x512xf32> to vector<2x256xf32>
    %506 = vector.broadcast %504 : f32 to vector<2x256xf32>
    %507 = arith.mulf %506, %505 : vector<2x256xf32>
    %508 = arith.addf %498, %507 : vector<2x256xf32>
    %c47 = arith.constant 47 : index
    %509 = memref.load %arg5[%c47] : memref<98xf32, #tpu.memory_space<smem>>
    %510 = vector.extract_strided_slice %57 {offsets = [0, 178], sizes = [2, 256], strides = [1, 1]} : vector<2x512xf32> to vector<2x256xf32>
    %511 = vector.broadcast %509 : f32 to vector<2x256xf32>
    %512 = arith.mulf %511, %510 : vector<2x256xf32>
    %513 = arith.addf %503, %512 : vector<2x256xf32>
    %c96 = arith.constant 96 : index
    %514 = memref.load %arg5[%c96] : memref<98xf32, #tpu.memory_space<smem>>
    %515 = vector.extract_strided_slice %59 {offsets = [0, 178], sizes = [2, 256], strides = [1, 1]} : vector<2x512xf32> to vector<2x256xf32>
    %516 = vector.broadcast %514 : f32 to vector<2x256xf32>
    %517 = arith.mulf %516, %515 : vector<2x256xf32>
    %518 = arith.addf %508, %517 : vector<2x256xf32>
    %519 = arith.addf %513, %518 : vector<2x256xf32>
    %520 = vector.extract_strided_slice %60 {offsets = [5, 0], sizes = [1, 256], strides = [1, 1]} : vector<7x256xf32> to vector<1x256xf32>
    %521 = vector.broadcast %520 : vector<1x256xf32> to vector<2x256xf32>
    %522 = arith.mulf %519, %521 : vector<2x256xf32>
    %523 = arith.addf %446, %522 : vector<2x256xf32>
    %cst_49 = arith.constant 0.000000e+00 : f32
    %524 = vector.broadcast %cst_49 : f32 to vector<2x256xf32>
    %cst_50 = arith.constant 0.000000e+00 : f32
    %525 = vector.broadcast %cst_50 : f32 to vector<2x256xf32>
    %c6 = arith.constant 6 : index
    %526 = memref.load %arg5[%c6] : memref<98xf32, #tpu.memory_space<smem>>
    %527 = vector.extract_strided_slice %57 {offsets = [0, 83], sizes = [2, 256], strides = [1, 1]} : vector<2x512xf32> to vector<2x256xf32>
    %528 = vector.broadcast %526 : f32 to vector<2x256xf32>
    %529 = arith.mulf %528, %527 : vector<2x256xf32>
    %530 = arith.addf %524, %529 : vector<2x256xf32>
    %c55 = arith.constant 55 : index
    %531 = memref.load %arg5[%c55] : memref<98xf32, #tpu.memory_space<smem>>
    %532 = vector.extract_strided_slice %59 {offsets = [0, 83], sizes = [2, 256], strides = [1, 1]} : vector<2x512xf32> to vector<2x256xf32>
    %533 = vector.broadcast %531 : f32 to vector<2x256xf32>
    %534 = arith.mulf %533, %532 : vector<2x256xf32>
    %535 = arith.addf %525, %534 : vector<2x256xf32>
    %c13 = arith.constant 13 : index
    %536 = memref.load %arg5[%c13] : memref<98xf32, #tpu.memory_space<smem>>
    %537 = vector.extract_strided_slice %57 {offsets = [0, 99], sizes = [2, 256], strides = [1, 1]} : vector<2x512xf32> to vector<2x256xf32>
    %538 = vector.broadcast %536 : f32 to vector<2x256xf32>
    %539 = arith.mulf %538, %537 : vector<2x256xf32>
    %540 = arith.addf %530, %539 : vector<2x256xf32>
    %c62 = arith.constant 62 : index
    %541 = memref.load %arg5[%c62] : memref<98xf32, #tpu.memory_space<smem>>
    %542 = vector.extract_strided_slice %59 {offsets = [0, 99], sizes = [2, 256], strides = [1, 1]} : vector<2x512xf32> to vector<2x256xf32>
    %543 = vector.broadcast %541 : f32 to vector<2x256xf32>
    %544 = arith.mulf %543, %542 : vector<2x256xf32>
    %545 = arith.addf %535, %544 : vector<2x256xf32>
    %c20 = arith.constant 20 : index
    %546 = memref.load %arg5[%c20] : memref<98xf32, #tpu.memory_space<smem>>
    %547 = vector.extract_strided_slice %57 {offsets = [0, 115], sizes = [2, 256], strides = [1, 1]} : vector<2x512xf32> to vector<2x256xf32>
    %548 = vector.broadcast %546 : f32 to vector<2x256xf32>
    %549 = arith.mulf %548, %547 : vector<2x256xf32>
    %550 = arith.addf %540, %549 : vector<2x256xf32>
    %c69 = arith.constant 69 : index
    %551 = memref.load %arg5[%c69] : memref<98xf32, #tpu.memory_space<smem>>
    %552 = vector.extract_strided_slice %59 {offsets = [0, 115], sizes = [2, 256], strides = [1, 1]} : vector<2x512xf32> to vector<2x256xf32>
    %553 = vector.broadcast %551 : f32 to vector<2x256xf32>
    %554 = arith.mulf %553, %552 : vector<2x256xf32>
    %555 = arith.addf %545, %554 : vector<2x256xf32>
    %c27 = arith.constant 27 : index
    %556 = memref.load %arg5[%c27] : memref<98xf32, #tpu.memory_space<smem>>
    %557 = vector.extract_strided_slice %57 {offsets = [0, 131], sizes = [2, 256], strides = [1, 1]} : vector<2x512xf32> to vector<2x256xf32>
    %558 = vector.broadcast %556 : f32 to vector<2x256xf32>
    %559 = arith.mulf %558, %557 : vector<2x256xf32>
    %560 = arith.addf %550, %559 : vector<2x256xf32>
    %c76 = arith.constant 76 : index
    %561 = memref.load %arg5[%c76] : memref<98xf32, #tpu.memory_space<smem>>
    %562 = vector.extract_strided_slice %59 {offsets = [0, 131], sizes = [2, 256], strides = [1, 1]} : vector<2x512xf32> to vector<2x256xf32>
    %563 = vector.broadcast %561 : f32 to vector<2x256xf32>
    %564 = arith.mulf %563, %562 : vector<2x256xf32>
    %565 = arith.addf %555, %564 : vector<2x256xf32>
    %c34 = arith.constant 34 : index
    %566 = memref.load %arg5[%c34] : memref<98xf32, #tpu.memory_space<smem>>
    %567 = vector.extract_strided_slice %57 {offsets = [0, 147], sizes = [2, 256], strides = [1, 1]} : vector<2x512xf32> to vector<2x256xf32>
    %568 = vector.broadcast %566 : f32 to vector<2x256xf32>
    %569 = arith.mulf %568, %567 : vector<2x256xf32>
    %570 = arith.addf %560, %569 : vector<2x256xf32>
    %c83 = arith.constant 83 : index
    %571 = memref.load %arg5[%c83] : memref<98xf32, #tpu.memory_space<smem>>
    %572 = vector.extract_strided_slice %59 {offsets = [0, 147], sizes = [2, 256], strides = [1, 1]} : vector<2x512xf32> to vector<2x256xf32>
    %573 = vector.broadcast %571 : f32 to vector<2x256xf32>
    %574 = arith.mulf %573, %572 : vector<2x256xf32>
    %575 = arith.addf %565, %574 : vector<2x256xf32>
    %c41 = arith.constant 41 : index
    %576 = memref.load %arg5[%c41] : memref<98xf32, #tpu.memory_space<smem>>
    %577 = vector.extract_strided_slice %57 {offsets = [0, 163], sizes = [2, 256], strides = [1, 1]} : vector<2x512xf32> to vector<2x256xf32>
    %578 = vector.broadcast %576 : f32 to vector<2x256xf32>
    %579 = arith.mulf %578, %577 : vector<2x256xf32>
    %580 = arith.addf %570, %579 : vector<2x256xf32>
    %c90 = arith.constant 90 : index
    %581 = memref.load %arg5[%c90] : memref<98xf32, #tpu.memory_space<smem>>
    %582 = vector.extract_strided_slice %59 {offsets = [0, 163], sizes = [2, 256], strides = [1, 1]} : vector<2x512xf32> to vector<2x256xf32>
    %583 = vector.broadcast %581 : f32 to vector<2x256xf32>
    %584 = arith.mulf %583, %582 : vector<2x256xf32>
    %585 = arith.addf %575, %584 : vector<2x256xf32>
    %c48 = arith.constant 48 : index
    %586 = memref.load %arg5[%c48] : memref<98xf32, #tpu.memory_space<smem>>
    %587 = vector.extract_strided_slice %57 {offsets = [0, 179], sizes = [2, 256], strides = [1, 1]} : vector<2x512xf32> to vector<2x256xf32>
    %588 = vector.broadcast %586 : f32 to vector<2x256xf32>
    %589 = arith.mulf %588, %587 : vector<2x256xf32>
    %590 = arith.addf %580, %589 : vector<2x256xf32>
    %c97 = arith.constant 97 : index
    %591 = memref.load %arg5[%c97] : memref<98xf32, #tpu.memory_space<smem>>
    %592 = vector.extract_strided_slice %59 {offsets = [0, 179], sizes = [2, 256], strides = [1, 1]} : vector<2x512xf32> to vector<2x256xf32>
    %593 = vector.broadcast %591 : f32 to vector<2x256xf32>
    %594 = arith.mulf %593, %592 : vector<2x256xf32>
    %595 = arith.addf %585, %594 : vector<2x256xf32>
    %596 = arith.addf %590, %595 : vector<2x256xf32>
    %597 = vector.extract_strided_slice %60 {offsets = [6, 0], sizes = [1, 256], strides = [1, 1]} : vector<7x256xf32> to vector<1x256xf32>
    %598 = vector.broadcast %597 : vector<1x256xf32> to vector<2x256xf32>
    %599 = arith.mulf %596, %598 : vector<2x256xf32>
    %600 = arith.addf %523, %599 : vector<2x256xf32>
    %601 = arith.negf %600 : vector<2x256xf32>
    %602 = math.exp %601 : vector<2x256xf32>
    %cst_51 = arith.constant 1.000000e+00 : f32
    %603 = vector.broadcast %cst_51 : f32 to vector<2x256xf32>
    %604 = arith.addf %603, %602 : vector<2x256xf32>
    %605 = arith.divf %603, %604 : vector<2x256xf32>
    %606 = vector.shape_cast %605 : vector<2x256xf32> to vector<2x1x256xf32>
    %607 = vector.broadcast %606 : vector<2x1x256xf32> to vector<2x32x256xf32>
    %608 = arith.mulf %43, %607 : vector<2x32x256xf32>
    %c0_52 = arith.constant 0 : index
    %c0_53 = arith.constant 0 : index
    %c0_54 = arith.constant 0 : index
    %609 = vector.load %arg6[%c0_52, %c0_53, %c0_54] : memref<2x32x256xf32, #tpu.memory_space<vmem>>, vector<2x32x256xf32>
    tpu.vector_store %arg6[%c0_52, %c0_53, %c0_54], %608 {strides = array<i32>} : memref<2x32x256xf32, #tpu.memory_space<vmem>>, vector<2x32x256xf32>,
    return
  }
  func.func @transform_0(%arg0: i32) -> (i32, i32, i32) {
    %c0_i32 = arith.constant 0 : i32
    %c0_i32_0 = arith.constant 0 : i32
    %c0_i32_1 = arith.constant 0 : i32
    return %arg0, %c0_i32, %c0_i32_0 : i32, i32, i32
  }
  func.func @transform_1(%arg0: i32) -> (i32, i32) {
    %c0_i32 = arith.constant 0 : i32
    %c0_i32_0 = arith.constant 0 : i32
    %c0_i32_1 = arith.constant 0 : i32
    return %c0_i32, %c0_i32_0 : i32, i32
  }
  func.func @transform_2(%arg0: i32) -> (i32, i32) {
    %c0_i32 = arith.constant 0 : i32
    %c0_i32_0 = arith.constant 0 : i32
    %c0_i32_1 = arith.constant 0 : i32
    return %c0_i32, %c0_i32_0 : i32, i32
  }
  func.func @transform_3(%arg0: i32) -> (i32, i32) {
    %c0_i32 = arith.constant 0 : i32
    %c0_i32_0 = arith.constant 0 : i32
    %c0_i32_1 = arith.constant 0 : i32
    return %c0_i32, %c0_i32_0 : i32, i32
  }
  func.func @transform_4(%arg0: i32) -> i32 {
    %c0_i32 = arith.constant 0 : i32
    %c0_i32_0 = arith.constant 0 : i32
    return %c0_i32 : i32
  }
  func.func @transform_5(%arg0: i32) -> (i32, i32, i32) {
    %c0_i32 = arith.constant 0 : i32
    %c0_i32_0 = arith.constant 0 : i32
    %c0_i32_1 = arith.constant 0 : i32
    return %arg0, %c0_i32, %c0_i32_0 : i32, i32, i32
  }
}

</mosaic_0001>

<llo_original>
// kernel: tpu_custom_call.1
$region0: #{tpu_custom_call.1}
  #allocation0 [shape = 'u32[]', space=smem, size = 0x4, offset = 0x4, fixed_abs, tag = 'smem constant byte address 0x4 - core index']
  #allocation1 [shape = 'u32[72,128]{1,0:T(1,128)}', space=vmem, size = 0x9000, scoped, tag = 'internal scratch']
  #allocation2 [shape = 'f32[2,2,512]{2,1,0:T(2,128)}', space=vmem, size = 0x2000, scoped, tag = 'scratch operand']
  %s0 = inlined_call_operand.hbm [shape: f32[2,32,256], index: 0, kind: input, shape index: {}]
  %s1 = inlined_call_operand.hbm [shape: f32[2,32], index: 1, kind: input, shape index: {}]
  %s2 = inlined_call_operand.hbm [shape: f32[2,32], index: 2, kind: input, shape index: {}]
  %s3 = inlined_call_operand.hbm [shape: f32[7,256], index: 3, kind: input, shape index: {}]
  %s4 = inlined_call_operand.vmem [shape: f32[98], index: 4, kind: input, shape index: {}]
  %s5 = inlined_call_operand.hbm [shape: f32[2,32,256], index: 5, kind: output, shape index: {}]
  %s6 = sld [smem:[#allocation0]]
  $region50: #{tpu_custom_call.1} parent=0
    _
  %s8 = ssub.s32 1, %s6
  %s9 = scalar_select 0, %s8, %s6
  $region1: #{tpu_custom_call.1} parent=0
    #allocation3 [shape = 'u8[65536]{0}', space=vmem, size = 0x10000, scoped, tag = 'input window, operand 0, single buffered']
    #allocation4 [shape = 's32[1]{0}', space=sflag, size = 0x4, scoped, tag = 'scoped memory for tpu_custom_call.1']
    #allocation5 [shape = 's32[1]{0}', space=sflag, size = 0x4, scoped, tag = 'scoped memory for tpu_custom_call.1']
    #allocation6 [shape = 's32[1]{0}', space=sflag, size = 0x4, scoped, tag = 'scoped memory for tpu_custom_call.1']
    #allocation7 [shape = 'u8[1024]{0}', space=vmem, size = 0x400, scoped, tag = 'input window, operand 1, single buffered']
    #allocation8 [shape = 's32[1]{0}', space=sflag, size = 0x4, scoped, tag = 'scoped memory for tpu_custom_call.1']
    #allocation9 [shape = 'u8[1024]{0}', space=vmem, size = 0x400, scoped, tag = 'input window, operand 2, single buffered']
    #allocation10 [shape = 'u8[8192]{0}', space=vmem, size = 0x2000, scoped, tag = 'input window, operand 3, single buffered']
    #allocation11 [shape = 's32[1]{0}', space=sflag, size = 0x4, scoped, tag = 'scoped memory for tpu_custom_call.1']
    #allocation12 [shape = 'u8[512]{0}', space=smem, size = 0x200, scoped, tag = 'input window, operand 4, single buffered']
    #allocation13 [shape = 'u8[65536]{0}', space=vmem, size = 0x10000, scoped, tag = 'output window, operand 0, single buffered']
    %10 = vsyncpa [#allocation4], 0
    %11 = vsyncpa [#allocation8], 0
    %12 = vsyncpa [#allocation11], 0
    %13 = vsyncpa [#allocation6], 0
    %14 = vsyncpa [#allocation5], 0
    // Predicated region
    $region2: #{tpu_custom_call.1} parent=1 // pred_check
      _
    $region3: #{tpu_custom_call.1} parent=1 // pred_check_branch
      %16 = sbr.rel (0) target = $region5
    $region4: #{tpu_custom_call.1} parent=1 // pred_region
      %18 = vsyncadd [#allocation4], 0
      %s19 = sshll.u32 %s0, 4
      %s20 = int_to_ptr.hbm [resolvable:$true] %s19
      %s21 = sshll.u32 [#allocation3], 4
      %s22 = int_to_ptr.vmem [resolvable:$true] %s21
      %27 = dma.hbm_to_vmem [thread:$0]  %s20, 2048, %s22, [#allocation4], 256, 256, 16
    $region5: #{tpu_custom_call.1} parent=1 // pred_fallthru
      _
    // Predicated region
    $region6: #{tpu_custom_call.1} parent=1 // pred_check
      _
    $region7: #{tpu_custom_call.1} parent=1 // pred_check_branch
      %29 = sbr.rel (0) target = $region9
    $region8: #{tpu_custom_call.1} parent=1 // pred_region
      %31 = vsyncadd [#allocation8], 0
      %s33 = sshll.u32 %s1, 4
      %s34 = int_to_ptr.hbm [resolvable:$true] %s33
      %s35 = sshll.u32 [#allocation7], 4
      %s36 = int_to_ptr.vmem [resolvable:$true] %s35
      %38 = dma.hbm_to_vmem [thread:$0]  %s34, 32, %s36, [#allocation8]
    $region9: #{tpu_custom_call.1} parent=1 // pred_fallthru
      _
    // Predicated region
    $region10: #{tpu_custom_call.1} parent=1 // pred_check
      _
    $region11: #{tpu_custom_call.1} parent=1 // pred_check_branch
      %40 = sbr.rel (0) target = $region13
    $region12: #{tpu_custom_call.1} parent=1 // pred_region
      %42 = vsyncadd [#allocation8], 0
      %s44 = sshll.u32 %s2, 4
      %s45 = int_to_ptr.hbm [resolvable:$true] %s44
      %s46 = sshll.u32 [#allocation9], 4
      %s47 = int_to_ptr.vmem [resolvable:$true] %s46
      %49 = dma.hbm_to_vmem [thread:$0]  %s45, 32, %s47, [#allocation8]
    $region13: #{tpu_custom_call.1} parent=1 // pred_fallthru
      _
    // Predicated region
    $region14: #{tpu_custom_call.1} parent=1 // pred_check
      _
    $region15: #{tpu_custom_call.1} parent=1 // pred_check_branch
      %51 = sbr.rel (0) target = $region17
    $region16: #{tpu_custom_call.1} parent=1 // pred_region
      %53 = vsyncadd [#allocation11], 0
      %s55 = sshll.u32 %s3, 4
      %s56 = int_to_ptr.hbm [resolvable:$true] %s55
      %s57 = sshll.u32 [#allocation10], 4
      %s58 = int_to_ptr.vmem [resolvable:$true] %s57
      %60 = dma.hbm_to_vmem [thread:$0]  %s56, 256, %s58, [#allocation11]
    $region17: #{tpu_custom_call.1} parent=1 // pred_fallthru
      _
    // Predicated region
    $region18: #{tpu_custom_call.1} parent=1 // pred_check
      _
    $region19: #{tpu_custom_call.1} parent=1 // pred_check_branch
      %62 = sbr.rel (0) target = $region21
    $region20: #{tpu_custom_call.1} parent=1 // pred_region
      %64 = vsyncadd [#allocation6], 0
      %s66 = sshll.u32 %s4, 4
      %s67 = int_to_ptr.vmem [resolvable:$true] %s66
      %69 = dma.vmem_to_smem %s67, 16, [#allocation12], [#allocation6]
    $region21: #{tpu_custom_call.1} parent=1 // pred_fallthru
      _
    // Predicated region
    $region22: #{tpu_custom_call.1} parent=1 // pred_check
      _
    $region23: #{tpu_custom_call.1} parent=1 // pred_check_branch
      %71 = sbr.rel (0) target = $region25
    $region24: #{tpu_custom_call.1} parent=1 // pred_region
      %73 = dma.done [#allocation4], 2048
    $region25: #{tpu_custom_call.1} parent=1 // pred_fallthru
      _
    // Predicated region
    $region26: #{tpu_custom_call.1} parent=1 // pred_check
      _
    $region27: #{tpu_custom_call.1} parent=1 // pred_check_branch
      %75 = sbr.rel (0) target = $region29
    $region28: #{tpu_custom_call.1} parent=1 // pred_region
      %77 = dma.done [#allocation8], 32
    $region29: #{tpu_custom_call.1} parent=1 // pred_fallthru
      _
    // Predicated region
    $region30: #{tpu_custom_call.1} parent=1 // pred_check
      _
    $region31: #{tpu_custom_call.1} parent=1 // pred_check_branch
      %79 = sbr.rel (0) target = $region33
    $region32: #{tpu_custom_call.1} parent=1 // pred_region
      %81 = dma.done [#allocation8], 32
    $region33: #{tpu_custom_call.1} parent=1 // pred_fallthru
      _
    // Predicated region
    $region34: #{tpu_custom_call.1} parent=1 // pred_check
      _
    $region35: #{tpu_custom_call.1} parent=1 // pred_check_branch
      %83 = sbr.rel (0) target = $region37
    $region36: #{tpu_custom_call.1} parent=1 // pred_region
      %85 = dma.done [#allocation11], 256
    $region37: #{tpu_custom_call.1} parent=1 // pred_fallthru
      _
    // Predicated region
    $region38: #{tpu_custom_call.1} parent=1 // pred_check
      _
    $region39: #{tpu_custom_call.1} parent=1 // pred_check_branch
      %87 = sbr.rel (0) target = $region41
    $region40: #{tpu_custom_call.1} parent=1 // pred_region
      %89 = dma.done [#allocation6], 16
    $region41: #{tpu_custom_call.1} parent=1 // pred_fallthru
      _
    %90 = sfence
    %v91 = vld [vmem:[#allocation3] sm:$0xff]
    %v92 = vld [vmem:[#allocation3 + $0x8] sm:$0xff]
    %v93 = vld [vmem:[#allocation3 + $0x10] sm:$0xff]
    %v94 = vld [vmem:[#allocation3 + $0x18] sm:$0xff]
    %v95 = vld [vmem:[#allocation3 + $0x20] sm:$0xff]
    %v96 = vld [vmem:[#allocation3 + $0x28] sm:$0xff]
    %v97 = vld [vmem:[#allocation3 + $0x30] sm:$0xff]
    %v98 = vld [vmem:[#allocation3 + $0x38] sm:$0xff]
    %v99 = vld [vmem:[#allocation3 + $0x40] sm:$0xff]
    %v100 = vld [vmem:[#allocation3 + $0x48] sm:$0xff]
    %v101 = vld [vmem:[#allocation3 + $0x50] sm:$0xff]
    %v102 = vld [vmem:[#allocation3 + $0x58] sm:$0xff]
    %v103 = vld [vmem:[#allocation3 + $0x60] sm:$0xff]
    %v104 = vld [vmem:[#allocation3 + $0x68] sm:$0xff]
    %v105 = vld [vmem:[#allocation3 + $0x70] sm:$0xff]
    %v106 = vld [vmem:[#allocation3 + $0x78] sm:$0xff]
    %v107 = vadd.f32 %v91, %v92
    %108 = vadd.xlane.f32.xlu0 %v107
    %v109 = vpop.xlane.xlu0 %108
    %v110 = vadd.f32 %v93, %v94
    %111 = vadd.xlane.f32.xlu0 %v110
    %v112 = vpop.xlane.xlu0 %111
    %v113 = vadd.f32 %v95, %v96
    %114 = vadd.xlane.f32.xlu0 %v113
    %v115 = vpop.xlane.xlu0 %114
    %v116 = vadd.f32 %v97, %v98
    %117 = vadd.xlane.f32.xlu0 %v116
    %v118 = vpop.xlane.xlu0 %117
    %v119 = vadd.f32 %v99, %v100
    %120 = vadd.xlane.f32.xlu0 %v119
    %v121 = vpop.xlane.xlu0 %120
    %v122 = vadd.f32 %v101, %v102
    %123 = vadd.xlane.f32.xlu0 %v122
    %v124 = vpop.xlane.xlu0 %123
    %v125 = vadd.f32 %v103, %v104
    %126 = vadd.xlane.f32.xlu0 %v125
    %v127 = vpop.xlane.xlu0 %126
    %v128 = vadd.f32 %v105, %v106
    %129 = vadd.xlane.f32.xlu0 %v128
    %v130 = vpop.xlane.xlu0 %129
    %v131 = vmul.f32 %v109, 0.00390625
    %v132 = vmul.f32 %v112, 0.00390625
    %v133 = vmul.f32 %v115, 0.00390625
    %v134 = vmul.f32 %v118, 0.00390625
    %v135 = vmul.f32 %v121, 0.00390625
    %v136 = vmul.f32 %v124, 0.00390625
    %v137 = vmul.f32 %v127, 0.00390625
    %v138 = vmul.f32 %v130, 0.00390625
    %v139 = vmax.f32 %v91, %v92
    %140 = vmax.xlane.f32.xlu0 %v139
    %v141 = vpop.xlane.xlu0 %140
    %v142 = vmax.f32 %v93, %v94
    %143 = vmax.xlane.f32.xlu0 %v142
    %v144 = vpop.xlane.xlu0 %143
    %v145 = vmax.f32 %v95, %v96
    %146 = vmax.xlane.f32.xlu0 %v145
    %v147 = vpop.xlane.xlu0 %146
    %v148 = vmax.f32 %v97, %v98
    %149 = vmax.xlane.f32.xlu0 %v148
    %v150 = vpop.xlane.xlu0 %149
    %v151 = vmax.f32 %v99, %v100
    %152 = vmax.xlane.f32.xlu0 %v151
    %v153 = vpop.xlane.xlu0 %152
    %v154 = vmax.f32 %v101, %v102
    %155 = vmax.xlane.f32.xlu0 %v154
    %v156 = vpop.xlane.xlu0 %155
    %v157 = vmax.f32 %v103, %v104
    %158 = vmax.xlane.f32.xlu0 %v157
    %v159 = vpop.xlane.xlu0 %158
    %v160 = vmax.f32 %v105, %v106
    %161 = vmax.xlane.f32.xlu0 %v160
    %v162 = vpop.xlane.xlu0 %161
    %v163 = vld [vmem:[#allocation7] sm:$0x3]
    %v164 = vld [vmem:[#allocation9] sm:$0x3]
    %v166 = vperm.slane %v163, 0
    %v167 = vlaneseq
    %v168 = vshrl.u32 %v167, 7
    %170 = vset.pattern.permute.xlu0 %v168
    %171 = vperm.xlu0 %170, %v166
    %v172 = vpop.permute.xlu0 %171
    %v173 = vlaneseq
    %v174 = vshrl.u32 %v173, 7
    %v175 = vadd.s32 %v174, 8
    %176 = vset.pattern.permute.xlu0 %v175
    %177 = vperm.xlu0 %176, %v166
    %v178 = vpop.permute.xlu0 %177
    %v179 = vlaneseq
    %v180 = vshrl.u32 %v179, 7
    %v181 = vadd.s32 %v180, 16
    %182 = vset.pattern.permute.xlu0 %v181
    %183 = vperm.xlu0 %182, %v166
    %v184 = vpop.permute.xlu0 %183
    %v185 = vlaneseq
    %v186 = vshrl.u32 %v185, 7
    %v187 = vadd.s32 %v186, 24
    %188 = vset.pattern.permute.xlu0 %v187
    %189 = vperm.xlu0 %188, %v166
    %v190 = vpop.permute.xlu0 %189
    %v191 = vperm.slane %v163, 1
    %v192 = vlaneseq
    %v193 = vshrl.u32 %v192, 7
    %195 = vset.pattern.permute.xlu0 %v193
    %196 = vperm.xlu0 %195, %v191
    %v197 = vpop.permute.xlu0 %196
    %v198 = vlaneseq
    %v199 = vshrl.u32 %v198, 7
    %v200 = vadd.s32 %v199, 8
    %201 = vset.pattern.permute.xlu0 %v200
    %202 = vperm.xlu0 %201, %v191
    %v203 = vpop.permute.xlu0 %202
    %v204 = vlaneseq
    %v205 = vshrl.u32 %v204, 7
    %v206 = vadd.s32 %v205, 16
    %207 = vset.pattern.permute.xlu0 %v206
    %208 = vperm.xlu0 %207, %v191
    %v209 = vpop.permute.xlu0 %208
    %v210 = vlaneseq
    %v211 = vshrl.u32 %v210, 7
    %v212 = vadd.s32 %v211, 24
    %213 = vset.pattern.permute.xlu0 %v212
    %214 = vperm.xlu0 %213, %v191
    %v215 = vpop.permute.xlu0 %214
    %v224 = vmul.f32 %v131, %v172
    %v225 = vmul.f32 %v132, %v178
    %v226 = vmul.f32 %v133, %v184
    %v227 = vmul.f32 %v134, %v190
    %v228 = vmul.f32 %v131, %v197
    %v229 = vmul.f32 %v132, %v203
    %v230 = vmul.f32 %v133, %v209
    %v231 = vmul.f32 %v134, %v215
    %v232 = vmul.f32 %v135, %v172
    %v233 = vmul.f32 %v136, %v178
    %v234 = vmul.f32 %v137, %v184
    %v235 = vmul.f32 %v138, %v190
    %v236 = vmul.f32 %v135, %v197
    %v237 = vmul.f32 %v136, %v203
    %v238 = vmul.f32 %v137, %v209
    %v239 = vmul.f32 %v138, %v215
    %256 = vset.pattern.permute.xlu0 0
    %257 = vperm.xlu0 %256, %v224
    %v258 = vpop.permute.xlu0 %257
    %259 = vset.pattern.permute.xlu0 0
    %260 = vperm.xlu0 %259, %v225
    %v261 = vpop.permute.xlu0 %260
    %262 = vset.pattern.permute.xlu0 0
    %263 = vperm.xlu0 %262, %v226
    %v264 = vpop.permute.xlu0 %263
    %265 = vset.pattern.permute.xlu0 0
    %266 = vperm.xlu0 %265, %v227
    %v267 = vpop.permute.xlu0 %266
    %268 = vset.pattern.permute.xlu0 0
    %269 = vperm.xlu0 %268, %v228
    %v270 = vpop.permute.xlu0 %269
    %271 = vset.pattern.permute.xlu0 0
    %272 = vperm.xlu0 %271, %v229
    %v273 = vpop.permute.xlu0 %272
    %274 = vset.pattern.permute.xlu0 0
    %275 = vperm.xlu0 %274, %v230
    %v276 = vpop.permute.xlu0 %275
    %277 = vset.pattern.permute.xlu0 0
    %278 = vperm.xlu0 %277, %v231
    %v279 = vpop.permute.xlu0 %278
    %280 = vset.pattern.permute.xlu0 0
    %281 = vperm.xlu0 %280, %v232
    %v282 = vpop.permute.xlu0 %281
    %283 = vset.pattern.permute.xlu0 0
    %284 = vperm.xlu0 %283, %v233
    %v285 = vpop.permute.xlu0 %284
    %286 = vset.pattern.permute.xlu0 0
    %287 = vperm.xlu0 %286, %v234
    %v288 = vpop.permute.xlu0 %287
    %289 = vset.pattern.permute.xlu0 0
    %290 = vperm.xlu0 %289, %v235
    %v291 = vpop.permute.xlu0 %290
    %292 = vset.pattern.permute.xlu0 0
    %293 = vperm.xlu0 %292, %v236
    %v294 = vpop.permute.xlu0 %293
    %295 = vset.pattern.permute.xlu0 0
    %296 = vperm.xlu0 %295, %v237
    %v297 = vpop.permute.xlu0 %296
    %298 = vset.pattern.permute.xlu0 0
    %299 = vperm.xlu0 %298, %v238
    %v300 = vpop.permute.xlu0 %299
    %301 = vset.pattern.permute.xlu0 0
    %302 = vperm.xlu0 %301, %v239
    %v303 = vpop.permute.xlu0 %302
    %v304 = vlaneseq
    %v305 = vand.u32 %v304, 127
    %v306 = vperm.slane %v258, %v305
    %v307 = vadd.s32 %v305, 4294967288
    %v308 = vperm.slane %v261, %v307
    %vm309 = vcmask 130112
    %v310 = vsel %vm309, %v308, %v306
    %v311 = vadd.s32 %v305, 4294967280
    %v312 = vperm.slane %v264, %v311
    %vm313 = vcmask 195712
    %v314 = vsel %vm313, %v312, %v310
    %v315 = vadd.s32 %v305, 4294967272
    %v316 = vperm.slane %v267, %v315
    %vm317 = vcmask 261312
    %v318 = vsel %vm317, %v316, %v314
    %v319 = vperm.slane %v270, %v305
    %v320 = vperm.slane %v273, %v307
    %v321 = vsel %vm309, %v320, %v319
    %v322 = vperm.slane %v276, %v311
    %v323 = vsel %vm313, %v322, %v321
    %v324 = vperm.slane %v279, %v315
    %v325 = vsel %vm317, %v324, %v323
    %v326 = vperm.slane %v282, %v305
    %v327 = vperm.slane %v285, %v307
    %v328 = vsel %vm309, %v327, %v326
    %v329 = vperm.slane %v288, %v311
    %v330 = vsel %vm313, %v329, %v328
    %v331 = vperm.slane %v291, %v315
    %v332 = vsel %vm317, %v331, %v330
    %v333 = vperm.slane %v294, %v305
    %v334 = vperm.slane %v297, %v307
    %v335 = vsel %vm309, %v334, %v333
    %v336 = vperm.slane %v300, %v311
    %v337 = vsel %vm313, %v336, %v335
    %v338 = vperm.slane %v303, %v315
    %v339 = vsel %vm317, %v338, %v337
    %vm340 = vcmask 1041409
    %v341 = vsel %vm340, %v325, %v318
    %v342 = vsel %vm340, %v339, %v332
    %vm345 = vcmask 254976
    %v346 = vsel %vm345, %v341, 0.0
    %347 = vadd.xlane.f32.xlu0 %v346
    %v348 = vpop.xlane.xlu0 %347
    %v349 = vsel %vm345, %v342, 0.0
    %350 = vadd.xlane.f32.xlu0 %v349
    %v351 = vpop.xlane.xlu0 %350
    %v352 = vmax.f32 %v348, 0.0
    %v353 = vmax.f32 %v351, 0.0
    %v354 = vmul.f32 %v141, %v172
    %v355 = vmul.f32 %v144, %v178
    %v356 = vmul.f32 %v147, %v184
    %v357 = vmul.f32 %v150, %v190
    %v358 = vmul.f32 %v141, %v197
    %v359 = vmul.f32 %v144, %v203
    %v360 = vmul.f32 %v147, %v209
    %v361 = vmul.f32 %v150, %v215
    %v362 = vmul.f32 %v153, %v172
    %v363 = vmul.f32 %v156, %v178
    %v364 = vmul.f32 %v159, %v184
    %v365 = vmul.f32 %v162, %v190
    %v366 = vmul.f32 %v153, %v197
    %v367 = vmul.f32 %v156, %v203
    %v368 = vmul.f32 %v159, %v209
    %v369 = vmul.f32 %v162, %v215
    %386 = vset.pattern.permute.xlu0 0
    %387 = vperm.xlu0 %386, %v354
    %v388 = vpop.permute.xlu0 %387
    %389 = vset.pattern.permute.xlu0 0
    %390 = vperm.xlu0 %389, %v355
    %v391 = vpop.permute.xlu0 %390
    %392 = vset.pattern.permute.xlu0 0
    %393 = vperm.xlu0 %392, %v356
    %v394 = vpop.permute.xlu0 %393
    %395 = vset.pattern.permute.xlu0 0
    %396 = vperm.xlu0 %395, %v357
    %v397 = vpop.permute.xlu0 %396
    %398 = vset.pattern.permute.xlu0 0
    %399 = vperm.xlu0 %398, %v358
    %v400 = vpop.permute.xlu0 %399
    %401 = vset.pattern.permute.xlu0 0
    %402 = vperm.xlu0 %401, %v359
    %v403 = vpop.permute.xlu0 %402
    %404 = vset.pattern.permute.xlu0 0
    %405 = vperm.xlu0 %404, %v360
    %v406 = vpop.permute.xlu0 %405
    %407 = vset.pattern.permute.xlu0 0
    %408 = vperm.xlu0 %407, %v361
    %v409 = vpop.permute.xlu0 %408
    %410 = vset.pattern.permute.xlu0 0
    %411 = vperm.xlu0 %410, %v362
    %v412 = vpop.permute.xlu0 %411
    %413 = vset.pattern.permute.xlu0 0
    %414 = vperm.xlu0 %413, %v363
    %v415 = vpop.permute.xlu0 %414
    %416 = vset.pattern.permute.xlu0 0
    %417 = vperm.xlu0 %416, %v364
    %v418 = vpop.permute.xlu0 %417
    %419 = vset.pattern.permute.xlu0 0
    %420 = vperm.xlu0 %419, %v365
    %v421 = vpop.permute.xlu0 %420
    %422 = vset.pattern.permute.xlu0 0
    %423 = vperm.xlu0 %422, %v366
    %v424 = vpop.permute.xlu0 %423
    %425 = vset.pattern.permute.xlu0 0
    %426 = vperm.xlu0 %425, %v367
    %v427 = vpop.permute.xlu0 %426
    %428 = vset.pattern.permute.xlu0 0
    %429 = vperm.xlu0 %428, %v368
    %v430 = vpop.permute.xlu0 %429
    %431 = vset.pattern.permute.xlu0 0
    %432 = vperm.xlu0 %431, %v369
    %v433 = vpop.permute.xlu0 %432
    %v434 = vperm.slane %v388, %v305
    %v435 = vperm.slane %v391, %v307
    %v436 = vsel %vm309, %v435, %v434
    %v437 = vperm.slane %v394, %v311
    %v438 = vsel %vm313, %v437, %v436
    %v439 = vperm.slane %v397, %v315
    %v440 = vsel %vm317, %v439, %v438
    %v441 = vperm.slane %v400, %v305
    %v442 = vperm.slane %v403, %v307
    %v443 = vsel %vm309, %v442, %v441
    %v444 = vperm.slane %v406, %v311
    %v445 = vsel %vm313, %v444, %v443
    %v446 = vperm.slane %v409, %v315
    %v447 = vsel %vm317, %v446, %v445
    %v448 = vperm.slane %v412, %v305
    %v449 = vperm.slane %v415, %v307
    %v450 = vsel %vm309, %v449, %v448
    %v451 = vperm.slane %v418, %v311
    %v452 = vsel %vm313, %v451, %v450
    %v453 = vperm.slane %v421, %v315
    %v454 = vsel %vm317, %v453, %v452
    %v455 = vperm.slane %v424, %v305
    %v456 = vperm.slane %v427, %v307
    %v457 = vsel %vm309, %v456, %v455
    %v458 = vperm.slane %v430, %v311
    %v459 = vsel %vm313, %v458, %v457
    %v460 = vperm.slane %v433, %v315
    %v461 = vsel %vm317, %v460, %v459
    %v462 = vsel %vm340, %v447, %v440
    %v463 = vsel %vm340, %v461, %v454
    %v466 = vsel %vm345, %v462, 0.0
    %467 = vadd.xlane.f32.xlu0 %v466
    %v468 = vpop.xlane.xlu0 %467
    %v469 = vsel %vm345, %v463, 0.0
    %470 = vadd.xlane.f32.xlu0 %v469
    %v471 = vpop.xlane.xlu0 %470
    %v472 = vmax.f32 %v468, 0.0
    %v473 = vmax.f32 %v471, 0.0
    %v474 = vmul.f32 %v352, %v164
    %v475 = vmul.f32 %v353, %v164
    %v476 = vsel %vm345, %v474, 0.0
    %v477 = vrot.slane %v476, 4
    %v478 = vadd.f32 %v476, %v477
    %v479 = vrot.slane %v478, 2
    %v480 = vadd.f32 %v478, %v479
    %v481 = vrot.slane %v480, 1
    %v482 = vadd.f32 %v480, %v481
    %v483 = vsel %vm345, %v475, 0.0
    %v484 = vrot.slane %v483, 4
    %v485 = vadd.f32 %v483, %v484
    %v486 = vrot.slane %v485, 2
    %v487 = vadd.f32 %v485, %v486
    %v488 = vrot.slane %v487, 1
    %v489 = vadd.f32 %v487, %v488
    %v490 = vmul.f32 %v472, %v164
    %v491 = vmul.f32 %v473, %v164
    %v492 = vsel %vm345, %v490, 0.0
    %v493 = vrot.slane %v492, 4
    %v494 = vadd.f32 %v492, %v493
    %v495 = vrot.slane %v494, 2
    %v496 = vadd.f32 %v494, %v495
    %v497 = vrot.slane %v496, 1
    %v498 = vadd.f32 %v496, %v497
    %v499 = vsel %vm345, %v491, 0.0
    %v500 = vrot.slane %v499, 4
    %v501 = vadd.f32 %v499, %v500
    %v502 = vrot.slane %v501, 2
    %v503 = vadd.f32 %v501, %v502
    %v504 = vrot.slane %v503, 1
    %v505 = vadd.f32 %v503, %v504
    %v506 = vadd.f32 %v482, %v498
    %v507 = vadd.f32 %v489, %v505
    %v508 = vxor.u32 %v506, 2147483648
    %v509 = vxor.u32 %v507, 2147483648
    %v510 = vmul.f32 %v508, 1.442695
    %v511 = vpow.pop %v510
    %v512 = vmul.f32 %v509, 1.442695
    %v513 = vpow.pop %v512
    %v514 = vadd.f32 %v511, 1.0
    %v515 = vadd.f32 %v513, 1.0
    %v516 = vrcp.pop %v514
    %v517 = vmul.f32 %v514, %v516
    %v518 = vsub.f32 1.0, %v517
    %v519 = vmul.f32 %v516, %v518
    %v520 = vadd.f32 %v516, %v519
    %vm521 = vweird.f32 %v514
    %vm522 = vweird.f32 %v516
    %vm523 = vmor %vm521, %vm522
    %v524 = vsel %vm523, %v516, %v520
    %v525 = vand.u32 2147483647, %v514
    %vm526 = vcmp.eq.f32.partialorder %v525, 8.507059e+37
    %v527 = vand.u32 %v514, 2147483648
    %v528 = vor.u32 1.1754944e-38, %v527
    %v529 = vsel %vm526, %v528, %v524
    %v530 = vmul.f32 1.0, %v529
    %v531 = vrcp.pop %v515
    %v532 = vmul.f32 %v515, %v531
    %v533 = vsub.f32 1.0, %v532
    %v534 = vmul.f32 %v531, %v533
    %v535 = vadd.f32 %v531, %v534
    %vm536 = vweird.f32 %v515
    %vm537 = vweird.f32 %v531
    %vm538 = vmor %vm536, %vm537
    %v539 = vsel %vm538, %v531, %v535
    %v540 = vand.u32 2147483647, %v515
    %vm541 = vcmp.eq.f32.partialorder %v540, 8.507059e+37
    %v542 = vand.u32 %v515, 2147483648
    %v543 = vor.u32 1.1754944e-38, %v542
    %v544 = vsel %vm541, %v543, %v539
    %v545 = vmul.f32 1.0, %v544
    %v546 = vlaneseq
    %v547 = vshrl.u32 %v546, 7
    %549 = vset.pattern.permute.xlu0 %v547
    %550 = vperm.xlu0 %549, %v530
    %v551 = vpop.permute.xlu0 %550
    %v552 = vlaneseq
    %v553 = vshrl.u32 %v552, 7
    %v554 = vadd.s32 %v553, 8
    %555 = vset.pattern.permute.xlu0 %v554
    %556 = vperm.xlu0 %555, %v530
    %v557 = vpop.permute.xlu0 %556
    %v558 = vlaneseq
    %v559 = vshrl.u32 %v558, 7
    %v560 = vadd.s32 %v559, 16
    %561 = vset.pattern.permute.xlu0 %v560
    %562 = vperm.xlu0 %561, %v530
    %v563 = vpop.permute.xlu0 %562
    %v564 = vlaneseq
    %v565 = vshrl.u32 %v564, 7
    %v566 = vadd.s32 %v565, 24
    %567 = vset.pattern.permute.xlu0 %v566
    %568 = vperm.xlu0 %567, %v530
    %v569 = vpop.permute.xlu0 %568
    %v570 = vlaneseq
    %v571 = vshrl.u32 %v570, 7
    %573 = vset.pattern.permute.xlu0 %v571
    %574 = vperm.xlu0 %573, %v545
    %v575 = vpop.permute.xlu0 %574
    %v576 = vlaneseq
    %v577 = vshrl.u32 %v576, 7
    %v578 = vadd.s32 %v577, 8
    %579 = vset.pattern.permute.xlu0 %v578
    %580 = vperm.xlu0 %579, %v545
    %v581 = vpop.permute.xlu0 %580
    %v582 = vlaneseq
    %v583 = vshrl.u32 %v582, 7
    %v584 = vadd.s32 %v583, 16
    %585 = vset.pattern.permute.xlu0 %v584
    %586 = vperm.xlu0 %585, %v545
    %v587 = vpop.permute.xlu0 %586
    %v588 = vlaneseq
    %v589 = vshrl.u32 %v588, 7
    %v590 = vadd.s32 %v589, 24
    %591 = vset.pattern.permute.xlu0 %v590
    %592 = vperm.xlu0 %591, %v545
    %v593 = vpop.permute.xlu0 %592
    %v594 = vmul.f32 %v91, %v551
    %v595 = vmul.f32 %v92, %v551
    %v596 = vmul.f32 %v93, %v557
    %v597 = vmul.f32 %v94, %v557
    %v598 = vmul.f32 %v95, %v563
    %v599 = vmul.f32 %v96, %v563
    %v600 = vmul.f32 %v97, %v569
    %v601 = vmul.f32 %v98, %v569
    %v602 = vmul.f32 %v99, %v575
    %v603 = vmul.f32 %v100, %v575
    %v604 = vmul.f32 %v101, %v581
    %v605 = vmul.f32 %v102, %v581
    %v606 = vmul.f32 %v103, %v587
    %v607 = vmul.f32 %v104, %v587
    %v608 = vmul.f32 %v105, %v593
    %v609 = vmul.f32 %v106, %v593
    %v610 = vadd.f32 %v594, %v596
    %v611 = vadd.f32 %v610, %v598
    %v612 = vadd.f32 %v611, %v600
    %v613 = vrot.slane %v612, 4
    %v614 = vadd.f32 %v612, %v613
    %v615 = vrot.slane %v614, 2
    %v616 = vadd.f32 %v614, %v615
    %v617 = vrot.slane %v616, 1
    %v618 = vadd.f32 %v616, %v617
    %v619 = vadd.f32 %v595, %v597
    %v620 = vadd.f32 %v619, %v599
    %v621 = vadd.f32 %v620, %v601
    %v622 = vrot.slane %v621, 4
    %v623 = vadd.f32 %v621, %v622
    %v624 = vrot.slane %v623, 2
    %v625 = vadd.f32 %v623, %v624
    %v626 = vrot.slane %v625, 1
    %v627 = vadd.f32 %v625, %v626
    %v628 = vadd.f32 %v602, %v604
    %v629 = vadd.f32 %v628, %v606
    %v630 = vadd.f32 %v629, %v608
    %v631 = vrot.slane %v630, 4
    %v632 = vadd.f32 %v630, %v631
    %v633 = vrot.slane %v632, 2
    %v634 = vadd.f32 %v632, %v633
    %v635 = vrot.slane %v634, 1
    %v636 = vadd.f32 %v634, %v635
    %v637 = vadd.f32 %v603, %v605
    %v638 = vadd.f32 %v637, %v607
    %v639 = vadd.f32 %v638, %v609
    %v640 = vrot.slane %v639, 4
    %v641 = vadd.f32 %v639, %v640
    %v642 = vrot.slane %v641, 2
    %v643 = vadd.f32 %v641, %v642
    %v644 = vrot.slane %v643, 1
    %v645 = vadd.f32 %v643, %v644
    %v646 = vmul.f32 %v618, 0.03125
    %v647 = vmul.f32 %v627, 0.03125
    %v648 = vmul.f32 %v636, 0.03125
    %v649 = vmul.f32 %v645, 0.03125
    %v650 = vmax.f32 %v594, %v596
    %v651 = vmax.f32 %v650, %v598
    %v652 = vmax.f32 %v651, %v600
    %v653 = vrot.slane %v652, 4
    %v654 = vmax.f32 %v652, %v653
    %v655 = vrot.slane %v654, 2
    %v656 = vmax.f32 %v654, %v655
    %v657 = vrot.slane %v656, 1
    %v658 = vmax.f32 %v656, %v657
    %v659 = vmax.f32 %v595, %v597
    %v660 = vmax.f32 %v659, %v599
    %v661 = vmax.f32 %v660, %v601
    %v662 = vrot.slane %v661, 4
    %v663 = vmax.f32 %v661, %v662
    %v664 = vrot.slane %v663, 2
    %v665 = vmax.f32 %v663, %v664
    %v666 = vrot.slane %v665, 1
    %v667 = vmax.f32 %v665, %v666
    %v668 = vmax.f32 %v602, %v604
    %v669 = vmax.f32 %v668, %v606
    %v670 = vmax.f32 %v669, %v608
    %v671 = vrot.slane %v670, 4
    %v672 = vmax.f32 %v670, %v671
    %v673 = vrot.slane %v672, 2
    %v674 = vmax.f32 %v672, %v673
    %v675 = vrot.slane %v674, 1
    %v676 = vmax.f32 %v674, %v675
    %v677 = vmax.f32 %v603, %v605
    %v678 = vmax.f32 %v677, %v607
    %v679 = vmax.f32 %v678, %v609
    %v680 = vrot.slane %v679, 4
    %v681 = vmax.f32 %v679, %v680
    %v682 = vrot.slane %v681, 2
    %v683 = vmax.f32 %v681, %v682
    %v684 = vrot.slane %v683, 1
    %v685 = vmax.f32 %v683, %v684
    %686 = vst [vmem:[#allocation2] sm:$0xff] 0.0
    %687 = vst [vmem:[#allocation2 + $0x8] sm:$0xff] 0.0
    %v692 = vrot.slane %v647, 6
    %v693 = vrot.slane %v649, 6
    %vm694 = vcmask 1041408
    %v695 = vsel %vm694, %v646, %v692
    %v696 = vsel %vm694, %v648, %v693
    %vm697 = vcmask 1042434
    %vm698 = vcmask 1044484
    %v699 = vsel %vm698, %v695, %v695
    %vm700 = vcmask 1046534
    %v701 = vsel %vm700, %v695, %v699
    %v702 = vrot.slane %v696, 7
    %v703 = vsel %vm340, %v702, %v701
    %vm704 = vcmask 1043459
    %v705 = vsel %vm704, %v702, %v703
    %vm706 = vcmask 1045509
    %v707 = vsel %vm706, %v702, %v705
    %vm708 = vcmask 1047559
    %v709 = vsel %vm708, %v702, %v707
    %711 = vst [vmem:[#allocation2 + $0x2] sm:$0xf] %v709
    %v716 = vrot.slane %v667, 6
    %v717 = vrot.slane %v685, 6
    %v718 = vsel %vm694, %v658, %v716
    %v719 = vsel %vm694, %v676, %v717
    %v720 = vsel %vm698, %v718, %v718
    %v721 = vsel %vm700, %v718, %v720
    %v722 = vrot.slane %v719, 7
    %v723 = vsel %vm340, %v722, %v721
    %v724 = vsel %vm704, %v722, %v723
    %v725 = vsel %vm706, %v722, %v724
    %v726 = vsel %vm708, %v722, %v725
    %s728 = scalar_lea.vmem [#allocation2], 8
    %729 = vst [vmem:[%s728 + $0x2] sm:$0xf] %v726
    %v730 = vld [vmem:[#allocation2] sm:$0xff]
    %v731 = vld [vmem:[%s728] sm:$0xff]
    %v732 = vld [vmem:[#allocation10] sm:$0x7f]
    %v733 = vld [vmem:[#allocation10 + $0x8] sm:$0x7f]
    %s734 = sld [smem:[#allocation12]]
    %v735 = vstv %s734
    %v736 = vmul.f32 %v735, %v730
    %v737 = vadd.f32 %v736, 0.0
    %s738 = sld [smem:[#allocation12 + $0x31]]
    %v739 = vstv %s738
    %v740 = vmul.f32 %v739, %v731
    %v741 = vadd.f32 %v740, 0.0
    %s742 = sld [smem:[#allocation12 + $0x7]]
    %v743 = vstv %s742
    %v744 = vmul.f32 %v743, %v730
    %746 = vrot.lane.b32.xlu0 %v744, 112
    %v747 = vpop.permute.xlu0 %746
    %v748 = vrot.slane %v747, 2
    %vm749 = vcmask 916480
    %v750 = vsel %vm749, %v747, %v748
    %v752 = vadd.f32 %v737, %v750
    %s753 = sld [smem:[#allocation12 + $0x38]]
    %v754 = vstv %s753
    %v755 = vmul.f32 %v754, %v731
    %757 = vrot.lane.b32.xlu0 %v755, 112
    %v758 = vpop.permute.xlu0 %757
    %v759 = vrot.slane %v758, 2
    %v760 = vsel %vm749, %v758, %v759
    %v762 = vadd.f32 %v741, %v760
    %s763 = sld [smem:[#allocation12 + $0xe]]
    %v764 = vstv %s763
    %v765 = vmul.f32 %v764, %v730
    %767 = vrot.lane.b32.xlu0 %v765, 96
    %v768 = vpop.permute.xlu0 %767
    %v769 = vrot.slane %v768, 2
    %vm770 = vcmask 785408
    %v771 = vsel %vm770, %v768, %v769
    %v773 = vadd.f32 %v752, %v771
    %s774 = sld [smem:[#allocation12 + $0x3f]]
    %v775 = vstv %s774
    %v776 = vmul.f32 %v775, %v731
    %778 = vrot.lane.b32.xlu0 %v776, 96
    %v779 = vpop.permute.xlu0 %778
    %v780 = vrot.slane %v779, 2
    %v781 = vsel %vm770, %v779, %v780
    %v783 = vadd.f32 %v762, %v781
    %s784 = sld [smem:[#allocation12 + $0x15]]
    %v785 = vstv %s784
    %v786 = vmul.f32 %v785, %v730
    %788 = vrot.lane.b32.xlu0 %v786, 80
    %v789 = vpop.permute.xlu0 %788
    %v790 = vrot.slane %v789, 2
    %vm791 = vcmask 654336
    %v792 = vsel %vm791, %v789, %v790
    %v794 = vadd.f32 %v773, %v792
    %s795 = sld [smem:[#allocation12 + $0x46]]
    %v796 = vstv %s795
    %v797 = vmul.f32 %v796, %v731
    %799 = vrot.lane.b32.xlu0 %v797, 80
    %v800 = vpop.permute.xlu0 %799
    %v801 = vrot.slane %v800, 2
    %v802 = vsel %vm791, %v800, %v801
    %v804 = vadd.f32 %v783, %v802
    %s805 = sld [smem:[#allocation12 + $0x1c]]
    %v806 = vstv %s805
    %808 = vrot.lane.b32.xlu0 %v730, 115
    %v809 = vpop.permute.xlu0 %808
    %v810 = vrot.slane %v809, 2
    %v811 = vrot.slane %v809, 4
    %vm812 = vcmask 941056
    %v813 = vsel %vm812, %v810, %v811
    %v815 = vmul.f32 %v806, %v813
    %817 = vrot.lane.b32.xlu0 %v815, 77
    %v818 = vpop.permute.xlu0 %817
    %v819 = vrot.slane %v818, 6
    %vm820 = vcmask 629760
    %v821 = vsel %vm820, %v819, %v818
    %v823 = vadd.f32 %v794, %v821
    %s824 = sld [smem:[#allocation12 + $0x4d]]
    %v825 = vstv %s824
    %827 = vrot.lane.b32.xlu0 %v731, 115
    %v828 = vpop.permute.xlu0 %827
    %v829 = vrot.slane %v828, 2
    %v830 = vrot.slane %v828, 4
    %v831 = vsel %vm812, %v829, %v830
    %v833 = vmul.f32 %v825, %v831
    %835 = vrot.lane.b32.xlu0 %v833, 77
    %v836 = vpop.permute.xlu0 %835
    %v837 = vrot.slane %v836, 6
    %v838 = vsel %vm820, %v837, %v836
    %v840 = vadd.f32 %v804, %v838
    %s841 = sld [smem:[#allocation12 + $0x23]]
    %v842 = vstv %s841
    %843 = vrot.lane.b32.xlu0 %v730, 99
    %v844 = vpop.permute.xlu0 %843
    %v845 = vrot.slane %v844, 2
    %v846 = vrot.slane %v844, 4
    %vm847 = vcmask 809984
    %v848 = vsel %vm847, %v845, %v846
    %v850 = vmul.f32 %v842, %v848
    %852 = vrot.lane.b32.xlu0 %v850, 77
    %v853 = vpop.permute.xlu0 %852
    %v854 = vrot.slane %v853, 6
    %v855 = vsel %vm820, %v854, %v853
    %v857 = vadd.f32 %v823, %v855
    %s858 = sld [smem:[#allocation12 + $0x54]]
    %v859 = vstv %s858
    %860 = vrot.lane.b32.xlu0 %v731, 99
    %v861 = vpop.permute.xlu0 %860
    %v862 = vrot.slane %v861, 2
    %v863 = vrot.slane %v861, 4
    %v864 = vsel %vm847, %v862, %v863
    %v866 = vmul.f32 %v859, %v864
    %868 = vrot.lane.b32.xlu0 %v866, 77
    %v869 = vpop.permute.xlu0 %868
    %v870 = vrot.slane %v869, 6
    %v871 = vsel %vm820, %v870, %v869
    %v873 = vadd.f32 %v840, %v871
    %s874 = sld [smem:[#allocation12 + $0x2a]]
    %v875 = vstv %s874
    %876 = vrot.lane.b32.xlu0 %v730, 83
    %v877 = vpop.permute.xlu0 %876
    %v878 = vrot.slane %v877, 2
    %v879 = vrot.slane %v877, 4
    %vm880 = vcmask 678912
    %v881 = vsel %vm880, %v878, %v879
    %v883 = vmul.f32 %v875, %v881
    %885 = vrot.lane.b32.xlu0 %v883, 77
    %v886 = vpop.permute.xlu0 %885
    %v887 = vrot.slane %v886, 6
    %v888 = vsel %vm820, %v887, %v886
    %v890 = vadd.f32 %v857, %v888
    %s891 = sld [smem:[#allocation12 + $0x5b]]
    %v892 = vstv %s891
    %893 = vrot.lane.b32.xlu0 %v731, 83
    %v894 = vpop.permute.xlu0 %893
    %v895 = vrot.slane %v894, 2
    %v896 = vrot.slane %v894, 4
    %v897 = vsel %vm880, %v895, %v896
    %v899 = vmul.f32 %v892, %v897
    %901 = vrot.lane.b32.xlu0 %v899, 77
    %v902 = vpop.permute.xlu0 %901
    %v903 = vrot.slane %v902, 6
    %v904 = vsel %vm820, %v903, %v902
    %v906 = vadd.f32 %v873, %v904
    %v907 = vadd.f32 %v890, %v906
    %v908 = vperm.slane %v732, 0
    %v909 = vperm.slane %v733, 0
    %v912 = vrot.slane %v909, 6
    %v913 = vsel %vm694, %v908, %v912
    %914 = vrot.lane.b32.xlu0 %v913, 77
    %v915 = vpop.permute.xlu0 %914
    %v916 = vrot.slane %v915, 6
    %v917 = vsel %vm820, %v916, %v915
    %v919 = vmul.f32 %v907, %v917
    %v920 = vadd.f32 %v919, 0.0
    %s921 = sld [smem:[#allocation12 + $0x1]]
    %v922 = vstv %s921
    %v923 = vmul.f32 %v922, %v730
    %v924 = vadd.f32 %v923, 0.0
    %s925 = sld [smem:[#allocation12 + $0x32]]
    %v926 = vstv %s925
    %v927 = vmul.f32 %v926, %v731
    %v928 = vadd.f32 %v927, 0.0
    %s929 = sld [smem:[#allocation12 + $0x8]]
    %v930 = vstv %s929
    %v931 = vmul.f32 %v930, %v730
    %933 = vrot.lane.b32.xlu0 %v931, 112
    %v934 = vpop.permute.xlu0 %933
    %v935 = vrot.slane %v934, 2
    %v936 = vsel %vm749, %v934, %v935
    %v938 = vadd.f32 %v924, %v936
    %s939 = sld [smem:[#allocation12 + $0x39]]
    %v940 = vstv %s939
    %v941 = vmul.f32 %v940, %v731
    %943 = vrot.lane.b32.xlu0 %v941, 112
    %v944 = vpop.permute.xlu0 %943
    %v945 = vrot.slane %v944, 2
    %v946 = vsel %vm749, %v944, %v945
    %v948 = vadd.f32 %v928, %v946
    %s949 = sld [smem:[#allocation12 + $0xf]]
    %v950 = vstv %s949
    %v951 = vmul.f32 %v950, %v730
    %953 = vrot.lane.b32.xlu0 %v951, 96
    %v954 = vpop.permute.xlu0 %953
    %v955 = vrot.slane %v954, 2
    %v956 = vsel %vm770, %v954, %v955
    %v958 = vadd.f32 %v938, %v956
    %s959 = sld [smem:[#allocation12 + $0x40]]
    %v960 = vstv %s959
    %v961 = vmul.f32 %v960, %v731
    %963 = vrot.lane.b32.xlu0 %v961, 96
    %v964 = vpop.permute.xlu0 %963
    %v965 = vrot.slane %v964, 2
    %v966 = vsel %vm770, %v964, %v965
    %v968 = vadd.f32 %v948, %v966
    %s969 = sld [smem:[#allocation12 + $0x16]]
    %v970 = vstv %s969
    %v971 = vmul.f32 %v970, %v730
    %973 = vrot.lane.b32.xlu0 %v971, 80
    %v974 = vpop.permute.xlu0 %973
    %v975 = vrot.slane %v974, 2
    %v976 = vsel %vm791, %v974, %v975
    %v978 = vadd.f32 %v958, %v976
    %s979 = sld [smem:[#allocation12 + $0x47]]
    %v980 = vstv %s979
    %v981 = vmul.f32 %v980, %v731
    %983 = vrot.lane.b32.xlu0 %v981, 80
    %v984 = vpop.permute.xlu0 %983
    %v985 = vrot.slane %v984, 2
    %v986 = vsel %vm791, %v984, %v985
    %v988 = vadd.f32 %v968, %v986
    %s989 = sld [smem:[#allocation12 + $0x1d]]
    %v990 = vstv %s989
    %991 = vrot.lane.b32.xlu0 %v730, 114
    %v992 = vpop.permute.xlu0 %991
    %v993 = vrot.slane %v992, 2
    %v994 = vrot.slane %v992, 4
    %vm995 = vcmask 932864
    %v996 = vsel %vm995, %v993, %v994
    %v998 = vmul.f32 %v990, %v996
    %1000 = vrot.lane.b32.xlu0 %v998, 78
    %v1001 = vpop.permute.xlu0 %1000
    %v1002 = vrot.slane %v1001, 6
    %vm1003 = vcmask 637952
    %v1004 = vsel %vm1003, %v1002, %v1001
    %v1006 = vadd.f32 %v978, %v1004
    %s1007 = sld [smem:[#allocation12 + $0x4e]]
    %v1008 = vstv %s1007
    %1009 = vrot.lane.b32.xlu0 %v731, 114
    %v1010 = vpop.permute.xlu0 %1009
    %v1011 = vrot.slane %v1010, 2
    %v1012 = vrot.slane %v1010, 4
    %v1013 = vsel %vm995, %v1011, %v1012
    %v1015 = vmul.f32 %v1008, %v1013
    %1017 = vrot.lane.b32.xlu0 %v1015, 78
    %v1018 = vpop.permute.xlu0 %1017
    %v1019 = vrot.slane %v1018, 6
    %v1020 = vsel %vm1003, %v1019, %v1018
    %v1022 = vadd.f32 %v988, %v1020
    %s1023 = sld [smem:[#allocation12 + $0x24]]
    %v1024 = vstv %s1023
    %1025 = vrot.lane.b32.xlu0 %v730, 98
    %v1026 = vpop.permute.xlu0 %1025
    %v1027 = vrot.slane %v1026, 2
    %v1028 = vrot.slane %v1026, 4
    %vm1029 = vcmask 801792
    %v1030 = vsel %vm1029, %v1027, %v1028
    %v1032 = vmul.f32 %v1024, %v1030
    %1034 = vrot.lane.b32.xlu0 %v1032, 78
    %v1035 = vpop.permute.xlu0 %1034
    %v1036 = vrot.slane %v1035, 6
    %v1037 = vsel %vm1003, %v1036, %v1035
    %v1039 = vadd.f32 %v1006, %v1037
    %s1040 = sld [smem:[#allocation12 + $0x55]]
    %v1041 = vstv %s1040
    %1042 = vrot.lane.b32.xlu0 %v731, 98
    %v1043 = vpop.permute.xlu0 %1042
    %v1044 = vrot.slane %v1043, 2
    %v1045 = vrot.slane %v1043, 4
    %v1046 = vsel %vm1029, %v1044, %v1045
    %v1048 = vmul.f32 %v1041, %v1046
    %1050 = vrot.lane.b32.xlu0 %v1048, 78
    %v1051 = vpop.permute.xlu0 %1050
    %v1052 = vrot.slane %v1051, 6
    %v1053 = vsel %vm1003, %v1052, %v1051
    %v1055 = vadd.f32 %v1022, %v1053
    %s1056 = sld [smem:[#allocation12 + $0x2b]]
    %v1057 = vstv %s1056
    %1058 = vrot.lane.b32.xlu0 %v730, 82
    %v1059 = vpop.permute.xlu0 %1058
    %v1060 = vrot.slane %v1059, 2
    %v1061 = vrot.slane %v1059, 4
    %vm1062 = vcmask 670720
    %v1063 = vsel %vm1062, %v1060, %v1061
    %v1065 = vmul.f32 %v1057, %v1063
    %1067 = vrot.lane.b32.xlu0 %v1065, 78
    %v1068 = vpop.permute.xlu0 %1067
    %v1069 = vrot.slane %v1068, 6
    %v1070 = vsel %vm1003, %v1069, %v1068
    %v1072 = vadd.f32 %v1039, %v1070
    %s1073 = sld [smem:[#allocation12 + $0x5c]]
    %v1074 = vstv %s1073
    %1075 = vrot.lane.b32.xlu0 %v731, 82
    %v1076 = vpop.permute.xlu0 %1075
    %v1077 = vrot.slane %v1076, 2
    %v1078 = vrot.slane %v1076, 4
    %v1079 = vsel %vm1062, %v1077, %v1078
    %v1081 = vmul.f32 %v1074, %v1079
    %1083 = vrot.lane.b32.xlu0 %v1081, 78
    %v1084 = vpop.permute.xlu0 %1083
    %v1085 = vrot.slane %v1084, 6
    %v1086 = vsel %vm1003, %v1085, %v1084
    %v1088 = vadd.f32 %v1055, %v1086
    %v1089 = vadd.f32 %v1072, %v1088
    %v1090 = vperm.slane %v732, 1
    %v1091 = vperm.slane %v733, 1
    %v1094 = vrot.slane %v1091, 6
    %v1095 = vsel %vm694, %v1090, %v1094
    %1096 = vrot.lane.b32.xlu0 %v1095, 78
    %v1097 = vpop.permute.xlu0 %1096
    %v1098 = vrot.slane %v1097, 6
    %v1099 = vsel %vm1003, %v1098, %v1097
    %v1101 = vmul.f32 %v1089, %v1099
    %1103 = vrot.lane.b32.xlu0 %v1101, 127
    %v1104 = vpop.permute.xlu0 %1103
    %v1105 = vrot.slane %v1104, 2
    %vm1106 = vcmask 1039360
    %v1107 = vsel %vm1106, %v1104, %v1105
    %v1109 = vadd.f32 %v920, %v1107
    %s1110 = sld [smem:[#allocation12 + $0x2]]
    %v1111 = vstv %s1110
    %v1112 = vmul.f32 %v1111, %v730
    %v1113 = vadd.f32 %v1112, 0.0
    %s1114 = sld [smem:[#allocation12 + $0x33]]
    %v1115 = vstv %s1114
    %v1116 = vmul.f32 %v1115, %v731
    %v1117 = vadd.f32 %v1116, 0.0
    %s1118 = sld [smem:[#allocation12 + $0x9]]
    %v1119 = vstv %s1118
    %v1120 = vmul.f32 %v1119, %v730
    %1122 = vrot.lane.b32.xlu0 %v1120, 112
    %v1123 = vpop.permute.xlu0 %1122
    %v1124 = vrot.slane %v1123, 2
    %v1125 = vsel %vm749, %v1123, %v1124
    %v1127 = vadd.f32 %v1113, %v1125
    %s1128 = sld [smem:[#allocation12 + $0x3a]]
    %v1129 = vstv %s1128
    %v1130 = vmul.f32 %v1129, %v731
    %1132 = vrot.lane.b32.xlu0 %v1130, 112
    %v1133 = vpop.permute.xlu0 %1132
    %v1134 = vrot.slane %v1133, 2
    %v1135 = vsel %vm749, %v1133, %v1134
    %v1137 = vadd.f32 %v1117, %v1135
    %s1138 = sld [smem:[#allocation12 + $0x10]]
    %v1139 = vstv %s1138
    %v1140 = vmul.f32 %v1139, %v730
    %1142 = vrot.lane.b32.xlu0 %v1140, 96
    %v1143 = vpop.permute.xlu0 %1142
    %v1144 = vrot.slane %v1143, 2
    %v1145 = vsel %vm770, %v1143, %v1144
    %v1147 = vadd.f32 %v1127, %v1145
    %s1148 = sld [smem:[#allocation12 + $0x41]]
    %v1149 = vstv %s1148
    %v1150 = vmul.f32 %v1149, %v731
    %1152 = vrot.lane.b32.xlu0 %v1150, 96
    %v1153 = vpop.permute.xlu0 %1152
    %v1154 = vrot.slane %v1153, 2
    %v1155 = vsel %vm770, %v1153, %v1154
    %v1157 = vadd.f32 %v1137, %v1155
    %s1158 = sld [smem:[#allocation12 + $0x17]]
    %v1159 = vstv %s1158
    %v1160 = vmul.f32 %v1159, %v730
    %1162 = vrot.lane.b32.xlu0 %v1160, 80
    %v1163 = vpop.permute.xlu0 %1162
    %v1164 = vrot.slane %v1163, 2
    %v1165 = vsel %vm791, %v1163, %v1164
    %v1167 = vadd.f32 %v1147, %v1165
    %s1168 = sld [smem:[#allocation12 + $0x48]]
    %v1169 = vstv %s1168
    %v1170 = vmul.f32 %v1169, %v731
    %1172 = vrot.lane.b32.xlu0 %v1170, 80
    %v1173 = vpop.permute.xlu0 %1172
    %v1174 = vrot.slane %v1173, 2
    %v1175 = vsel %vm791, %v1173, %v1174
    %v1177 = vadd.f32 %v1157, %v1175
    %s1178 = sld [smem:[#allocation12 + $0x1e]]
    %v1179 = vstv %s1178
    %1180 = vrot.lane.b32.xlu0 %v730, 113
    %v1181 = vpop.permute.xlu0 %1180
    %v1182 = vrot.slane %v1181, 2
    %v1183 = vrot.slane %v1181, 4
    %vm1184 = vcmask 924672
    %v1185 = vsel %vm1184, %v1182, %v1183
    %v1187 = vmul.f32 %v1179, %v1185
    %1189 = vrot.lane.b32.xlu0 %v1187, 79
    %v1190 = vpop.permute.xlu0 %1189
    %v1191 = vrot.slane %v1190, 6
    %vm1192 = vcmask 646144
    %v1193 = vsel %vm1192, %v1191, %v1190
    %v1195 = vadd.f32 %v1167, %v1193
    %s1196 = sld [smem:[#allocation12 + $0x4f]]
    %v1197 = vstv %s1196
    %1198 = vrot.lane.b32.xlu0 %v731, 113
    %v1199 = vpop.permute.xlu0 %1198
    %v1200 = vrot.slane %v1199, 2
    %v1201 = vrot.slane %v1199, 4
    %v1202 = vsel %vm1184, %v1200, %v1201
    %v1204 = vmul.f32 %v1197, %v1202
    %1206 = vrot.lane.b32.xlu0 %v1204, 79
    %v1207 = vpop.permute.xlu0 %1206
    %v1208 = vrot.slane %v1207, 6
    %v1209 = vsel %vm1192, %v1208, %v1207
    %v1211 = vadd.f32 %v1177, %v1209
    %s1212 = sld [smem:[#allocation12 + $0x25]]
    %v1213 = vstv %s1212
    %1214 = vrot.lane.b32.xlu0 %v730, 97
    %v1215 = vpop.permute.xlu0 %1214
    %v1216 = vrot.slane %v1215, 2
    %v1217 = vrot.slane %v1215, 4
    %vm1218 = vcmask 793600
    %v1219 = vsel %vm1218, %v1216, %v1217
    %v1221 = vmul.f32 %v1213, %v1219
    %1223 = vrot.lane.b32.xlu0 %v1221, 79
    %v1224 = vpop.permute.xlu0 %1223
    %v1225 = vrot.slane %v1224, 6
    %v1226 = vsel %vm1192, %v1225, %v1224
    %v1228 = vadd.f32 %v1195, %v1226
    %s1229 = sld [smem:[#allocation12 + $0x56]]
    %v1230 = vstv %s1229
    %1231 = vrot.lane.b32.xlu0 %v731, 97
    %v1232 = vpop.permute.xlu0 %1231
    %v1233 = vrot.slane %v1232, 2
    %v1234 = vrot.slane %v1232, 4
    %v1235 = vsel %vm1218, %v1233, %v1234
    %v1237 = vmul.f32 %v1230, %v1235
    %1239 = vrot.lane.b32.xlu0 %v1237, 79
    %v1240 = vpop.permute.xlu0 %1239
    %v1241 = vrot.slane %v1240, 6
    %v1242 = vsel %vm1192, %v1241, %v1240
    %v1244 = vadd.f32 %v1211, %v1242
    %s1245 = sld [smem:[#allocation12 + $0x2c]]
    %v1246 = vstv %s1245
    %1247 = vrot.lane.b32.xlu0 %v730, 81
    %v1248 = vpop.permute.xlu0 %1247
    %v1249 = vrot.slane %v1248, 2
    %v1250 = vrot.slane %v1248, 4
    %vm1251 = vcmask 662528
    %v1252 = vsel %vm1251, %v1249, %v1250
    %v1254 = vmul.f32 %v1246, %v1252
    %1256 = vrot.lane.b32.xlu0 %v1254, 79
    %v1257 = vpop.permute.xlu0 %1256
    %v1258 = vrot.slane %v1257, 6
    %v1259 = vsel %vm1192, %v1258, %v1257
    %v1261 = vadd.f32 %v1228, %v1259
    %s1262 = sld [smem:[#allocation12 + $0x5d]]
    %v1263 = vstv %s1262
    %1264 = vrot.lane.b32.xlu0 %v731, 81
    %v1265 = vpop.permute.xlu0 %1264
    %v1266 = vrot.slane %v1265, 2
    %v1267 = vrot.slane %v1265, 4
    %v1268 = vsel %vm1251, %v1266, %v1267
    %v1270 = vmul.f32 %v1263, %v1268
    %1272 = vrot.lane.b32.xlu0 %v1270, 79
    %v1273 = vpop.permute.xlu0 %1272
    %v1274 = vrot.slane %v1273, 6
    %v1275 = vsel %vm1192, %v1274, %v1273
    %v1277 = vadd.f32 %v1244, %v1275
    %v1278 = vadd.f32 %v1261, %v1277
    %v1279 = vperm.slane %v732, 2
    %v1280 = vperm.slane %v733, 2
    %v1283 = vrot.slane %v1280, 6
    %v1284 = vsel %vm694, %v1279, %v1283
    %1285 = vrot.lane.b32.xlu0 %v1284, 79
    %v1286 = vpop.permute.xlu0 %1285
    %v1287 = vrot.slane %v1286, 6
    %v1288 = vsel %vm1192, %v1287, %v1286
    %v1290 = vmul.f32 %v1278, %v1288
    %1292 = vrot.lane.b32.xlu0 %v1290, 126
    %v1293 = vpop.permute.xlu0 %1292
    %v1294 = vrot.slane %v1293, 2
    %vm1295 = vcmask 1031168
    %v1296 = vsel %vm1295, %v1293, %v1294
    %v1298 = vadd.f32 %v1109, %v1296
    %s1299 = sld [smem:[#allocation12 + $0x3]]
    %v1300 = vstv %s1299
    %v1301 = vmul.f32 %v1300, %v730
    %v1302 = vadd.f32 %v1301, 0.0
    %s1303 = sld [smem:[#allocation12 + $0x34]]
    %v1304 = vstv %s1303
    %v1305 = vmul.f32 %v1304, %v731
    %v1306 = vadd.f32 %v1305, 0.0
    %s1307 = sld [smem:[#allocation12 + $0xa]]
    %v1308 = vstv %s1307
    %v1309 = vmul.f32 %v1308, %v730
    %1311 = vrot.lane.b32.xlu0 %v1309, 112
    %v1312 = vpop.permute.xlu0 %1311
    %v1313 = vrot.slane %v1312, 2
    %v1314 = vsel %vm749, %v1312, %v1313
    %v1316 = vadd.f32 %v1302, %v1314
    %s1317 = sld [smem:[#allocation12 + $0x3b]]
    %v1318 = vstv %s1317
    %v1319 = vmul.f32 %v1318, %v731
    %1321 = vrot.lane.b32.xlu0 %v1319, 112
    %v1322 = vpop.permute.xlu0 %1321
    %v1323 = vrot.slane %v1322, 2
    %v1324 = vsel %vm749, %v1322, %v1323
    %v1326 = vadd.f32 %v1306, %v1324
    %s1327 = sld [smem:[#allocation12 + $0x11]]
    %v1328 = vstv %s1327
    %v1329 = vmul.f32 %v1328, %v730
    %1331 = vrot.lane.b32.xlu0 %v1329, 96
    %v1332 = vpop.permute.xlu0 %1331
    %v1333 = vrot.slane %v1332, 2
    %v1334 = vsel %vm770, %v1332, %v1333
    %v1336 = vadd.f32 %v1316, %v1334
    %s1337 = sld [smem:[#allocation12 + $0x42]]
    %v1338 = vstv %s1337
    %v1339 = vmul.f32 %v1338, %v731
    %1341 = vrot.lane.b32.xlu0 %v1339, 96
    %v1342 = vpop.permute.xlu0 %1341
    %v1343 = vrot.slane %v1342, 2
    %v1344 = vsel %vm770, %v1342, %v1343
    %v1346 = vadd.f32 %v1326, %v1344
    %s1347 = sld [smem:[#allocation12 + $0x18]]
    %v1348 = vstv %s1347
    %v1349 = vrot.slane %v730, 2
    %v1351 = vmul.f32 %v1348, %v1349
    %1353 = vrot.lane.b32.xlu0 %v1351, 80
    %v1354 = vpop.permute.xlu0 %1353
    %v1355 = vrot.slane %v1354, 6
    %v1356 = vsel %vm791, %v1355, %v1354
    %v1358 = vadd.f32 %v1336, %v1356
    %s1359 = sld [smem:[#allocation12 + $0x49]]
    %v1360 = vstv %s1359
    %v1361 = vrot.slane %v731, 2
    %v1363 = vmul.f32 %v1360, %v1361
    %1365 = vrot.lane.b32.xlu0 %v1363, 80
    %v1366 = vpop.permute.xlu0 %1365
    %v1367 = vrot.slane %v1366, 6
    %v1368 = vsel %vm791, %v1367, %v1366
    %v1370 = vadd.f32 %v1346, %v1368
    %s1371 = sld [smem:[#allocation12 + $0x1f]]
    %v1372 = vstv %s1371
    %1373 = vrot.lane.b32.xlu0 %v730, 112
    %v1374 = vpop.permute.xlu0 %1373
    %v1375 = vrot.slane %v1374, 2
    %v1376 = vrot.slane %v1374, 4
    %v1377 = vsel %vm749, %v1375, %v1376
    %v1379 = vmul.f32 %v1372, %v1377
    %1381 = vrot.lane.b32.xlu0 %v1379, 80
    %v1382 = vpop.permute.xlu0 %1381
    %v1383 = vrot.slane %v1382, 6
    %v1384 = vsel %vm791, %v1383, %v1382
    %v1386 = vadd.f32 %v1358, %v1384
    %s1387 = sld [smem:[#allocation12 + $0x50]]
    %v1388 = vstv %s1387
    %1389 = vrot.lane.b32.xlu0 %v731, 112
    %v1390 = vpop.permute.xlu0 %1389
    %v1391 = vrot.slane %v1390, 2
    %v1392 = vrot.slane %v1390, 4
    %v1393 = vsel %vm749, %v1391, %v1392
    %v1395 = vmul.f32 %v1388, %v1393
    %1397 = vrot.lane.b32.xlu0 %v1395, 80
    %v1398 = vpop.permute.xlu0 %1397
    %v1399 = vrot.slane %v1398, 6
    %v1400 = vsel %vm791, %v1399, %v1398
    %v1402 = vadd.f32 %v1370, %v1400
    %s1403 = sld [smem:[#allocation12 + $0x26]]
    %v1404 = vstv %s1403
    %1405 = vrot.lane.b32.xlu0 %v730, 96
    %v1406 = vpop.permute.xlu0 %1405
    %v1407 = vrot.slane %v1406, 2
    %v1408 = vrot.slane %v1406, 4
    %v1409 = vsel %vm770, %v1407, %v1408
    %v1411 = vmul.f32 %v1404, %v1409
    %1413 = vrot.lane.b32.xlu0 %v1411, 80
    %v1414 = vpop.permute.xlu0 %1413
    %v1415 = vrot.slane %v1414, 6
    %v1416 = vsel %vm791, %v1415, %v1414
    %v1418 = vadd.f32 %v1386, %v1416
    %s1419 = sld [smem:[#allocation12 + $0x57]]
    %v1420 = vstv %s1419
    %1421 = vrot.lane.b32.xlu0 %v731, 96
    %v1422 = vpop.permute.xlu0 %1421
    %v1423 = vrot.slane %v1422, 2
    %v1424 = vrot.slane %v1422, 4
    %v1425 = vsel %vm770, %v1423, %v1424
    %v1427 = vmul.f32 %v1420, %v1425
    %1429 = vrot.lane.b32.xlu0 %v1427, 80
    %v1430 = vpop.permute.xlu0 %1429
    %v1431 = vrot.slane %v1430, 6
    %v1432 = vsel %vm791, %v1431, %v1430
    %v1434 = vadd.f32 %v1402, %v1432
    %s1435 = sld [smem:[#allocation12 + $0x2d]]
    %v1436 = vstv %s1435
    %1437 = vrot.lane.b32.xlu0 %v730, 80
    %v1438 = vpop.permute.xlu0 %1437
    %v1439 = vrot.slane %v1438, 2
    %v1440 = vrot.slane %v1438, 4
    %v1441 = vsel %vm791, %v1439, %v1440
    %v1443 = vmul.f32 %v1436, %v1441
    %1445 = vrot.lane.b32.xlu0 %v1443, 80
    %v1446 = vpop.permute.xlu0 %1445
    %v1447 = vrot.slane %v1446, 6
    %v1448 = vsel %vm791, %v1447, %v1446
    %v1450 = vadd.f32 %v1418, %v1448
    %s1451 = sld [smem:[#allocation12 + $0x5e]]
    %v1452 = vstv %s1451
    %1453 = vrot.lane.b32.xlu0 %v731, 80
    %v1454 = vpop.permute.xlu0 %1453
    %v1455 = vrot.slane %v1454, 2
    %v1456 = vrot.slane %v1454, 4
    %v1457 = vsel %vm791, %v1455, %v1456
    %v1459 = vmul.f32 %v1452, %v1457
    %1461 = vrot.lane.b32.xlu0 %v1459, 80
    %v1462 = vpop.permute.xlu0 %1461
    %v1463 = vrot.slane %v1462, 6
    %v1464 = vsel %vm791, %v1463, %v1462
    %v1466 = vadd.f32 %v1434, %v1464
    %v1467 = vadd.f32 %v1450, %v1466
    %v1468 = vperm.slane %v732, 3
    %v1469 = vperm.slane %v733, 3
    %v1472 = vrot.slane %v1469, 6
    %v1473 = vsel %vm694, %v1468, %v1472
    %1474 = vrot.lane.b32.xlu0 %v1473, 80
    %v1475 = vpop.permute.xlu0 %1474
    %v1476 = vrot.slane %v1475, 6
    %v1477 = vsel %vm791, %v1476, %v1475
    %v1479 = vmul.f32 %v1467, %v1477
    %1481 = vrot.lane.b32.xlu0 %v1479, 125
    %v1482 = vpop.permute.xlu0 %1481
    %v1483 = vrot.slane %v1482, 2
    %vm1484 = vcmask 1022976
    %v1485 = vsel %vm1484, %v1482, %v1483
    %v1487 = vadd.f32 %v1298, %v1485
    %s1488 = sld [smem:[#allocation12 + $0x4]]
    %v1489 = vstv %s1488
    %v1490 = vmul.f32 %v1489, %v730
    %v1491 = vadd.f32 %v1490, 0.0
    %s1492 = sld [smem:[#allocation12 + $0x35]]
    %v1493 = vstv %s1492
    %v1494 = vmul.f32 %v1493, %v731
    %v1495 = vadd.f32 %v1494, 0.0
    %s1496 = sld [smem:[#allocation12 + $0xb]]
    %v1497 = vstv %s1496
    %v1498 = vmul.f32 %v1497, %v730
    %1500 = vrot.lane.b32.xlu0 %v1498, 112
    %v1501 = vpop.permute.xlu0 %1500
    %v1502 = vrot.slane %v1501, 2
    %v1503 = vsel %vm749, %v1501, %v1502
    %v1505 = vadd.f32 %v1491, %v1503
    %s1506 = sld [smem:[#allocation12 + $0x3c]]
    %v1507 = vstv %s1506
    %v1508 = vmul.f32 %v1507, %v731
    %1510 = vrot.lane.b32.xlu0 %v1508, 112
    %v1511 = vpop.permute.xlu0 %1510
    %v1512 = vrot.slane %v1511, 2
    %v1513 = vsel %vm749, %v1511, %v1512
    %v1515 = vadd.f32 %v1495, %v1513
    %s1516 = sld [smem:[#allocation12 + $0x12]]
    %v1517 = vstv %s1516
    %v1518 = vmul.f32 %v1517, %v730
    %1520 = vrot.lane.b32.xlu0 %v1518, 96
    %v1521 = vpop.permute.xlu0 %1520
    %v1522 = vrot.slane %v1521, 2
    %v1523 = vsel %vm770, %v1521, %v1522
    %v1525 = vadd.f32 %v1505, %v1523
    %s1526 = sld [smem:[#allocation12 + $0x43]]
    %v1527 = vstv %s1526
    %v1528 = vmul.f32 %v1527, %v731
    %1530 = vrot.lane.b32.xlu0 %v1528, 96
    %v1531 = vpop.permute.xlu0 %1530
    %v1532 = vrot.slane %v1531, 2
    %v1533 = vsel %vm770, %v1531, %v1532
    %v1535 = vadd.f32 %v1515, %v1533
    %s1536 = sld [smem:[#allocation12 + $0x19]]
    %v1537 = vstv %s1536
    %1538 = vrot.lane.b32.xlu0 %v730, 127
    %v1539 = vpop.permute.xlu0 %1538
    %v1540 = vrot.slane %v1539, 2
    %v1541 = vrot.slane %v1539, 4
    %v1542 = vsel %vm1106, %v1540, %v1541
    %v1544 = vmul.f32 %v1537, %v1542
    %1546 = vrot.lane.b32.xlu0 %v1544, 81
    %v1547 = vpop.permute.xlu0 %1546
    %v1548 = vrot.slane %v1547, 6
    %v1549 = vsel %vm1251, %v1548, %v1547
    %v1551 = vadd.f32 %v1525, %v1549
    %s1552 = sld [smem:[#allocation12 + $0x4a]]
    %v1553 = vstv %s1552
    %1554 = vrot.lane.b32.xlu0 %v731, 127
    %v1555 = vpop.permute.xlu0 %1554
    %v1556 = vrot.slane %v1555, 2
    %v1557 = vrot.slane %v1555, 4
    %v1558 = vsel %vm1106, %v1556, %v1557
    %v1560 = vmul.f32 %v1553, %v1558
    %1562 = vrot.lane.b32.xlu0 %v1560, 81
    %v1563 = vpop.permute.xlu0 %1562
    %v1564 = vrot.slane %v1563, 6
    %v1565 = vsel %vm1251, %v1564, %v1563
    %v1567 = vadd.f32 %v1535, %v1565
    %s1568 = sld [smem:[#allocation12 + $0x20]]
    %v1569 = vstv %s1568
    %1570 = vrot.lane.b32.xlu0 %v730, 111
    %v1571 = vpop.permute.xlu0 %1570
    %v1572 = vrot.slane %v1571, 2
    %v1573 = vrot.slane %v1571, 4
    %vm1574 = vcmask 908288
    %v1575 = vsel %vm1574, %v1572, %v1573
    %v1577 = vmul.f32 %v1569, %v1575
    %1579 = vrot.lane.b32.xlu0 %v1577, 81
    %v1580 = vpop.permute.xlu0 %1579
    %v1581 = vrot.slane %v1580, 6
    %v1582 = vsel %vm1251, %v1581, %v1580
    %v1584 = vadd.f32 %v1551, %v1582
    %s1585 = sld [smem:[#allocation12 + $0x51]]
    %v1586 = vstv %s1585
    %1587 = vrot.lane.b32.xlu0 %v731, 111
    %v1588 = vpop.permute.xlu0 %1587
    %v1589 = vrot.slane %v1588, 2
    %v1590 = vrot.slane %v1588, 4
    %v1591 = vsel %vm1574, %v1589, %v1590
    %v1593 = vmul.f32 %v1586, %v1591
    %1595 = vrot.lane.b32.xlu0 %v1593, 81
    %v1596 = vpop.permute.xlu0 %1595
    %v1597 = vrot.slane %v1596, 6
    %v1598 = vsel %vm1251, %v1597, %v1596
    %v1600 = vadd.f32 %v1567, %v1598
    %s1601 = sld [smem:[#allocation12 + $0x27]]
    %v1602 = vstv %s1601
    %1603 = vrot.lane.b32.xlu0 %v730, 95
    %v1604 = vpop.permute.xlu0 %1603
    %v1605 = vrot.slane %v1604, 2
    %v1606 = vrot.slane %v1604, 4
    %vm1607 = vcmask 777216
    %v1608 = vsel %vm1607, %v1605, %v1606
    %v1610 = vmul.f32 %v1602, %v1608
    %1612 = vrot.lane.b32.xlu0 %v1610, 81
    %v1613 = vpop.permute.xlu0 %1612
    %v1614 = vrot.slane %v1613, 6
    %v1615 = vsel %vm1251, %v1614, %v1613
    %v1617 = vadd.f32 %v1584, %v1615
    %s1618 = sld [smem:[#allocation12 + $0x58]]
    %v1619 = vstv %s1618
    %1620 = vrot.lane.b32.xlu0 %v731, 95
    %v1621 = vpop.permute.xlu0 %1620
    %v1622 = vrot.slane %v1621, 2
    %v1623 = vrot.slane %v1621, 4
    %v1624 = vsel %vm1607, %v1622, %v1623
    %v1626 = vmul.f32 %v1619, %v1624
    %1628 = vrot.lane.b32.xlu0 %v1626, 81
    %v1629 = vpop.permute.xlu0 %1628
    %v1630 = vrot.slane %v1629, 6
    %v1631 = vsel %vm1251, %v1630, %v1629
    %v1633 = vadd.f32 %v1600, %v1631
    %s1634 = sld [smem:[#allocation12 + $0x2e]]
    %v1635 = vstv %s1634
    %1636 = vrot.lane.b32.xlu0 %v730, 79
    %v1637 = vpop.permute.xlu0 %1636
    %v1638 = vrot.slane %v1637, 2
    %v1639 = vrot.slane %v1637, 4
    %v1640 = vsel %vm1192, %v1638, %v1639
    %v1642 = vmul.f32 %v1635, %v1640
    %1644 = vrot.lane.b32.xlu0 %v1642, 81
    %v1645 = vpop.permute.xlu0 %1644
    %v1646 = vrot.slane %v1645, 6
    %v1647 = vsel %vm1251, %v1646, %v1645
    %v1649 = vadd.f32 %v1617, %v1647
    %s1650 = sld [smem:[#allocation12 + $0x5f]]
    %v1651 = vstv %s1650
    %1652 = vrot.lane.b32.xlu0 %v731, 79
    %v1653 = vpop.permute.xlu0 %1652
    %v1654 = vrot.slane %v1653, 2
    %v1655 = vrot.slane %v1653, 4
    %v1656 = vsel %vm1192, %v1654, %v1655
    %v1658 = vmul.f32 %v1651, %v1656
    %1660 = vrot.lane.b32.xlu0 %v1658, 81
    %v1661 = vpop.permute.xlu0 %1660
    %v1662 = vrot.slane %v1661, 6
    %v1663 = vsel %vm1251, %v1662, %v1661
    %v1665 = vadd.f32 %v1633, %v1663
    %v1666 = vadd.f32 %v1649, %v1665
    %v1667 = vperm.slane %v732, 4
    %v1668 = vperm.slane %v733, 4
    %v1671 = vrot.slane %v1668, 6
    %v1672 = vsel %vm694, %v1667, %v1671
    %1673 = vrot.lane.b32.xlu0 %v1672, 81
    %v1674 = vpop.permute.xlu0 %1673
    %v1675 = vrot.slane %v1674, 6
    %v1676 = vsel %vm1251, %v1675, %v1674
    %v1678 = vmul.f32 %v1666, %v1676
    %1680 = vrot.lane.b32.xlu0 %v1678, 124
    %v1681 = vpop.permute.xlu0 %1680
    %v1682 = vrot.slane %v1681, 2
    %vm1683 = vcmask 1014784
    %v1684 = vsel %vm1683, %v1681, %v1682
    %v1686 = vadd.f32 %v1487, %v1684
    %s1687 = sld [smem:[#allocation12 + $0x5]]
    %v1688 = vstv %s1687
    %v1689 = vmul.f32 %v1688, %v730
    %v1690 = vadd.f32 %v1689, 0.0
    %s1691 = sld [smem:[#allocation12 + $0x36]]
    %v1692 = vstv %s1691
    %v1693 = vmul.f32 %v1692, %v731
    %v1694 = vadd.f32 %v1693, 0.0
    %s1695 = sld [smem:[#allocation12 + $0xc]]
    %v1696 = vstv %s1695
    %v1697 = vmul.f32 %v1696, %v730
    %1699 = vrot.lane.b32.xlu0 %v1697, 112
    %v1700 = vpop.permute.xlu0 %1699
    %v1701 = vrot.slane %v1700, 2
    %v1702 = vsel %vm749, %v1700, %v1701
    %v1704 = vadd.f32 %v1690, %v1702
    %s1705 = sld [smem:[#allocation12 + $0x3d]]
    %v1706 = vstv %s1705
    %v1707 = vmul.f32 %v1706, %v731
    %1709 = vrot.lane.b32.xlu0 %v1707, 112
    %v1710 = vpop.permute.xlu0 %1709
    %v1711 = vrot.slane %v1710, 2
    %v1712 = vsel %vm749, %v1710, %v1711
    %v1714 = vadd.f32 %v1694, %v1712
    %s1715 = sld [smem:[#allocation12 + $0x13]]
    %v1716 = vstv %s1715
    %v1717 = vmul.f32 %v1716, %v730
    %1719 = vrot.lane.b32.xlu0 %v1717, 96
    %v1720 = vpop.permute.xlu0 %1719
    %v1721 = vrot.slane %v1720, 2
    %v1722 = vsel %vm770, %v1720, %v1721
    %v1724 = vadd.f32 %v1704, %v1722
    %s1725 = sld [smem:[#allocation12 + $0x44]]
    %v1726 = vstv %s1725
    %v1727 = vmul.f32 %v1726, %v731
    %1729 = vrot.lane.b32.xlu0 %v1727, 96
    %v1730 = vpop.permute.xlu0 %1729
    %v1731 = vrot.slane %v1730, 2
    %v1732 = vsel %vm770, %v1730, %v1731
    %v1734 = vadd.f32 %v1714, %v1732
    %s1735 = sld [smem:[#allocation12 + $0x1a]]
    %v1736 = vstv %s1735
    %1737 = vrot.lane.b32.xlu0 %v730, 126
    %v1738 = vpop.permute.xlu0 %1737
    %v1739 = vrot.slane %v1738, 2
    %v1740 = vrot.slane %v1738, 4
    %v1741 = vsel %vm1295, %v1739, %v1740
    %v1743 = vmul.f32 %v1736, %v1741
    %1745 = vrot.lane.b32.xlu0 %v1743, 82
    %v1746 = vpop.permute.xlu0 %1745
    %v1747 = vrot.slane %v1746, 6
    %v1748 = vsel %vm1062, %v1747, %v1746
    %v1750 = vadd.f32 %v1724, %v1748
    %s1751 = sld [smem:[#allocation12 + $0x4b]]
    %v1752 = vstv %s1751
    %1753 = vrot.lane.b32.xlu0 %v731, 126
    %v1754 = vpop.permute.xlu0 %1753
    %v1755 = vrot.slane %v1754, 2
    %v1756 = vrot.slane %v1754, 4
    %v1757 = vsel %vm1295, %v1755, %v1756
    %v1759 = vmul.f32 %v1752, %v1757
    %1761 = vrot.lane.b32.xlu0 %v1759, 82
    %v1762 = vpop.permute.xlu0 %1761
    %v1763 = vrot.slane %v1762, 6
    %v1764 = vsel %vm1062, %v1763, %v1762
    %v1766 = vadd.f32 %v1734, %v1764
    %s1767 = sld [smem:[#allocation12 + $0x21]]
    %v1768 = vstv %s1767
    %1769 = vrot.lane.b32.xlu0 %v730, 110
    %v1770 = vpop.permute.xlu0 %1769
    %v1771 = vrot.slane %v1770, 2
    %v1772 = vrot.slane %v1770, 4
    %vm1773 = vcmask 900096
    %v1774 = vsel %vm1773, %v1771, %v1772
    %v1776 = vmul.f32 %v1768, %v1774
    %1778 = vrot.lane.b32.xlu0 %v1776, 82
    %v1779 = vpop.permute.xlu0 %1778
    %v1780 = vrot.slane %v1779, 6
    %v1781 = vsel %vm1062, %v1780, %v1779
    %v1783 = vadd.f32 %v1750, %v1781
    %s1784 = sld [smem:[#allocation12 + $0x52]]
    %v1785 = vstv %s1784
    %1786 = vrot.lane.b32.xlu0 %v731, 110
    %v1787 = vpop.permute.xlu0 %1786
    %v1788 = vrot.slane %v1787, 2
    %v1789 = vrot.slane %v1787, 4
    %v1790 = vsel %vm1773, %v1788, %v1789
    %v1792 = vmul.f32 %v1785, %v1790
    %1794 = vrot.lane.b32.xlu0 %v1792, 82
    %v1795 = vpop.permute.xlu0 %1794
    %v1796 = vrot.slane %v1795, 6
    %v1797 = vsel %vm1062, %v1796, %v1795
    %v1799 = vadd.f32 %v1766, %v1797
    %s1800 = sld [smem:[#allocation12 + $0x28]]
    %v1801 = vstv %s1800
    %1802 = vrot.lane.b32.xlu0 %v730, 94
    %v1803 = vpop.permute.xlu0 %1802
    %v1804 = vrot.slane %v1803, 2
    %v1805 = vrot.slane %v1803, 4
    %vm1806 = vcmask 769024
    %v1807 = vsel %vm1806, %v1804, %v1805
    %v1809 = vmul.f32 %v1801, %v1807
    %1811 = vrot.lane.b32.xlu0 %v1809, 82
    %v1812 = vpop.permute.xlu0 %1811
    %v1813 = vrot.slane %v1812, 6
    %v1814 = vsel %vm1062, %v1813, %v1812
    %v1816 = vadd.f32 %v1783, %v1814
    %s1817 = sld [smem:[#allocation12 + $0x59]]
    %v1818 = vstv %s1817
    %1819 = vrot.lane.b32.xlu0 %v731, 94
    %v1820 = vpop.permute.xlu0 %1819
    %v1821 = vrot.slane %v1820, 2
    %v1822 = vrot.slane %v1820, 4
    %v1823 = vsel %vm1806, %v1821, %v1822
    %v1825 = vmul.f32 %v1818, %v1823
    %1827 = vrot.lane.b32.xlu0 %v1825, 82
    %v1828 = vpop.permute.xlu0 %1827
    %v1829 = vrot.slane %v1828, 6
    %v1830 = vsel %vm1062, %v1829, %v1828
    %v1832 = vadd.f32 %v1799, %v1830
    %s1833 = sld [smem:[#allocation12 + $0x2f]]
    %v1834 = vstv %s1833
    %1835 = vrot.lane.b32.xlu0 %v730, 78
    %v1836 = vpop.permute.xlu0 %1835
    %v1837 = vrot.slane %v1836, 2
    %v1838 = vrot.slane %v1836, 4
    %v1839 = vsel %vm1003, %v1837, %v1838
    %v1841 = vmul.f32 %v1834, %v1839
    %1843 = vrot.lane.b32.xlu0 %v1841, 82
    %v1844 = vpop.permute.xlu0 %1843
    %v1845 = vrot.slane %v1844, 6
    %v1846 = vsel %vm1062, %v1845, %v1844
    %v1848 = vadd.f32 %v1816, %v1846
    %s1849 = sld [smem:[#allocation12 + $0x60]]
    %v1850 = vstv %s1849
    %1851 = vrot.lane.b32.xlu0 %v731, 78
    %v1852 = vpop.permute.xlu0 %1851
    %v1853 = vrot.slane %v1852, 2
    %v1854 = vrot.slane %v1852, 4
    %v1855 = vsel %vm1003, %v1853, %v1854
    %v1857 = vmul.f32 %v1850, %v1855
    %1859 = vrot.lane.b32.xlu0 %v1857, 82
    %v1860 = vpop.permute.xlu0 %1859
    %v1861 = vrot.slane %v1860, 6
    %v1862 = vsel %vm1062, %v1861, %v1860
    %v1864 = vadd.f32 %v1832, %v1862
    %v1865 = vadd.f32 %v1848, %v1864
    %v1866 = vperm.slane %v732, 5
    %v1867 = vperm.slane %v733, 5
    %v1870 = vrot.slane %v1867, 6
    %v1871 = vsel %vm694, %v1866, %v1870
    %1872 = vrot.lane.b32.xlu0 %v1871, 82
    %v1873 = vpop.permute.xlu0 %1872
    %v1874 = vrot.slane %v1873, 6
    %v1875 = vsel %vm1062, %v1874, %v1873
    %v1877 = vmul.f32 %v1865, %v1875
    %1879 = vrot.lane.b32.xlu0 %v1877, 123
    %v1880 = vpop.permute.xlu0 %1879
    %v1881 = vrot.slane %v1880, 2
    %vm1882 = vcmask 1006592
    %v1883 = vsel %vm1882, %v1880, %v1881
    %v1885 = vadd.f32 %v1686, %v1883
    %s1886 = sld [smem:[#allocation12 + $0x6]]
    %v1887 = vstv %s1886
    %v1888 = vmul.f32 %v1887, %v730
    %v1889 = vadd.f32 %v1888, 0.0
    %s1890 = sld [smem:[#allocation12 + $0x37]]
    %v1891 = vstv %s1890
    %v1892 = vmul.f32 %v1891, %v731
    %v1893 = vadd.f32 %v1892, 0.0
    %s1894 = sld [smem:[#allocation12 + $0xd]]
    %v1895 = vstv %s1894
    %v1896 = vmul.f32 %v1895, %v730
    %1898 = vrot.lane.b32.xlu0 %v1896, 112
    %v1899 = vpop.permute.xlu0 %1898
    %v1900 = vrot.slane %v1899, 2
    %v1901 = vsel %vm749, %v1899, %v1900
    %v1903 = vadd.f32 %v1889, %v1901
    %s1904 = sld [smem:[#allocation12 + $0x3e]]
    %v1905 = vstv %s1904
    %v1906 = vmul.f32 %v1905, %v731
    %1908 = vrot.lane.b32.xlu0 %v1906, 112
    %v1909 = vpop.permute.xlu0 %1908
    %v1910 = vrot.slane %v1909, 2
    %v1911 = vsel %vm749, %v1909, %v1910
    %v1913 = vadd.f32 %v1893, %v1911
    %s1914 = sld [smem:[#allocation12 + $0x14]]
    %v1915 = vstv %s1914
    %v1916 = vmul.f32 %v1915, %v730
    %1918 = vrot.lane.b32.xlu0 %v1916, 96
    %v1919 = vpop.permute.xlu0 %1918
    %v1920 = vrot.slane %v1919, 2
    %v1921 = vsel %vm770, %v1919, %v1920
    %v1923 = vadd.f32 %v1903, %v1921
    %s1924 = sld [smem:[#allocation12 + $0x45]]
    %v1925 = vstv %s1924
    %v1926 = vmul.f32 %v1925, %v731
    %1928 = vrot.lane.b32.xlu0 %v1926, 96
    %v1929 = vpop.permute.xlu0 %1928
    %v1930 = vrot.slane %v1929, 2
    %v1931 = vsel %vm770, %v1929, %v1930
    %v1933 = vadd.f32 %v1913, %v1931
    %s1934 = sld [smem:[#allocation12 + $0x1b]]
    %v1935 = vstv %s1934
    %1936 = vrot.lane.b32.xlu0 %v730, 125
    %v1937 = vpop.permute.xlu0 %1936
    %v1938 = vrot.slane %v1937, 2
    %v1939 = vrot.slane %v1937, 4
    %v1940 = vsel %vm1484, %v1938, %v1939
    %v1942 = vmul.f32 %v1935, %v1940
    %1944 = vrot.lane.b32.xlu0 %v1942, 83
    %v1945 = vpop.permute.xlu0 %1944
    %v1946 = vrot.slane %v1945, 6
    %v1947 = vsel %vm880, %v1946, %v1945
    %v1949 = vadd.f32 %v1923, %v1947
    %s1950 = sld [smem:[#allocation12 + $0x4c]]
    %v1951 = vstv %s1950
    %1952 = vrot.lane.b32.xlu0 %v731, 125
    %v1953 = vpop.permute.xlu0 %1952
    %v1954 = vrot.slane %v1953, 2
    %v1955 = vrot.slane %v1953, 4
    %v1956 = vsel %vm1484, %v1954, %v1955
    %v1958 = vmul.f32 %v1951, %v1956
    %1960 = vrot.lane.b32.xlu0 %v1958, 83
    %v1961 = vpop.permute.xlu0 %1960
    %v1962 = vrot.slane %v1961, 6
    %v1963 = vsel %vm880, %v1962, %v1961
    %v1965 = vadd.f32 %v1933, %v1963
    %s1966 = sld [smem:[#allocation12 + $0x22]]
    %v1967 = vstv %s1966
    %1968 = vrot.lane.b32.xlu0 %v730, 109
    %v1969 = vpop.permute.xlu0 %1968
    %v1970 = vrot.slane %v1969, 2
    %v1971 = vrot.slane %v1969, 4
    %vm1972 = vcmask 891904
    %v1973 = vsel %vm1972, %v1970, %v1971
    %v1975 = vmul.f32 %v1967, %v1973
    %1977 = vrot.lane.b32.xlu0 %v1975, 83
    %v1978 = vpop.permute.xlu0 %1977
    %v1979 = vrot.slane %v1978, 6
    %v1980 = vsel %vm880, %v1979, %v1978
    %v1982 = vadd.f32 %v1949, %v1980
    %s1983 = sld [smem:[#allocation12 + $0x53]]
    %v1984 = vstv %s1983
    %1985 = vrot.lane.b32.xlu0 %v731, 109
    %v1986 = vpop.permute.xlu0 %1985
    %v1987 = vrot.slane %v1986, 2
    %v1988 = vrot.slane %v1986, 4
    %v1989 = vsel %vm1972, %v1987, %v1988
    %v1991 = vmul.f32 %v1984, %v1989
    %1993 = vrot.lane.b32.xlu0 %v1991, 83
    %v1994 = vpop.permute.xlu0 %1993
    %v1995 = vrot.slane %v1994, 6
    %v1996 = vsel %vm880, %v1995, %v1994
    %v1998 = vadd.f32 %v1965, %v1996
    %s1999 = sld [smem:[#allocation12 + $0x29]]
    %v2000 = vstv %s1999
    %2001 = vrot.lane.b32.xlu0 %v730, 93
    %v2002 = vpop.permute.xlu0 %2001
    %v2003 = vrot.slane %v2002, 2
    %v2004 = vrot.slane %v2002, 4
    %vm2005 = vcmask 760832
    %v2006 = vsel %vm2005, %v2003, %v2004
    %v2008 = vmul.f32 %v2000, %v2006
    %2010 = vrot.lane.b32.xlu0 %v2008, 83
    %v2011 = vpop.permute.xlu0 %2010
    %v2012 = vrot.slane %v2011, 6
    %v2013 = vsel %vm880, %v2012, %v2011
    %v2015 = vadd.f32 %v1982, %v2013
    %s2016 = sld [smem:[#allocation12 + $0x5a]]
    %v2017 = vstv %s2016
    %2018 = vrot.lane.b32.xlu0 %v731, 93
    %v2019 = vpop.permute.xlu0 %2018
    %v2020 = vrot.slane %v2019, 2
    %v2021 = vrot.slane %v2019, 4
    %v2022 = vsel %vm2005, %v2020, %v2021
    %v2024 = vmul.f32 %v2017, %v2022
    %2026 = vrot.lane.b32.xlu0 %v2024, 83
    %v2027 = vpop.permute.xlu0 %2026
    %v2028 = vrot.slane %v2027, 6
    %v2029 = vsel %vm880, %v2028, %v2027
    %v2031 = vadd.f32 %v1998, %v2029
    %s2032 = sld [smem:[#allocation12 + $0x30]]
    %v2033 = vstv %s2032
    %2034 = vrot.lane.b32.xlu0 %v730, 77
    %v2035 = vpop.permute.xlu0 %2034
    %v2036 = vrot.slane %v2035, 2
    %v2037 = vrot.slane %v2035, 4
    %v2038 = vsel %vm820, %v2036, %v2037
    %v2040 = vmul.f32 %v2033, %v2038
    %2042 = vrot.lane.b32.xlu0 %v2040, 83
    %v2043 = vpop.permute.xlu0 %2042
    %v2044 = vrot.slane %v2043, 6
    %v2045 = vsel %vm880, %v2044, %v2043
    %v2047 = vadd.f32 %v2015, %v2045
    %s2048 = sld [smem:[#allocation12 + $0x61]]
    %v2049 = vstv %s2048
    %2050 = vrot.lane.b32.xlu0 %v731, 77
    %v2051 = vpop.permute.xlu0 %2050
    %v2052 = vrot.slane %v2051, 2
    %v2053 = vrot.slane %v2051, 4
    %v2054 = vsel %vm820, %v2052, %v2053
    %v2056 = vmul.f32 %v2049, %v2054
    %2058 = vrot.lane.b32.xlu0 %v2056, 83
    %v2059 = vpop.permute.xlu0 %2058
    %v2060 = vrot.slane %v2059, 6
    %v2061 = vsel %vm880, %v2060, %v2059
    %v2063 = vadd.f32 %v2031, %v2061
    %v2064 = vadd.f32 %v2047, %v2063
    %v2065 = vperm.slane %v732, 6
    %v2066 = vperm.slane %v733, 6
    %v2069 = vrot.slane %v2066, 6
    %v2070 = vsel %vm694, %v2065, %v2069
    %2071 = vrot.lane.b32.xlu0 %v2070, 83
    %v2072 = vpop.permute.xlu0 %2071
    %v2073 = vrot.slane %v2072, 6
    %v2074 = vsel %vm880, %v2073, %v2072
    %v2076 = vmul.f32 %v2064, %v2074
    %2078 = vrot.lane.b32.xlu0 %v2076, 122
    %v2079 = vpop.permute.xlu0 %2078
    %v2080 = vrot.slane %v2079, 2
    %vm2081 = vcmask 998400
    %v2082 = vsel %vm2081, %v2079, %v2080
    %v2084 = vadd.f32 %v1885, %v2082
    %v2085 = vxor.u32 %v2084, 2147483648
    %v2086 = vmul.f32 %v2085, 1.442695
    %v2087 = vpow.pop %v2086
    %v2088 = vadd.f32 %v2087, 1.0
    %v2089 = vrcp.pop %v2088
    %v2090 = vmul.f32 %v2088, %v2089
    %v2091 = vsub.f32 1.0, %v2090
    %v2092 = vmul.f32 %v2089, %v2091
    %v2093 = vadd.f32 %v2089, %v2092
    %vm2094 = vweird.f32 %v2088
    %vm2095 = vweird.f32 %v2089
    %vm2096 = vmor %vm2094, %vm2095
    %v2097 = vsel %vm2096, %v2089, %v2093
    %v2098 = vand.u32 2147483647, %v2088
    %vm2099 = vcmp.eq.f32.partialorder %v2098, 8.507059e+37
    %v2100 = vand.u32 %v2088, 2147483648
    %v2101 = vor.u32 1.1754944e-38, %v2100
    %v2102 = vsel %vm2099, %v2101, %v2097
    %v2103 = vmul.f32 1.0, %v2102
    %v2105 = vrot.slane %v2103, 1
    %v2106 = vrot.slane %v2103, 2
    %v2107 = vrot.slane %v2103, 3
    %vm2108 = vcmask 1040384
    %v2109 = vsel %vm2108, %v2103, %v2105
    %v2110 = vsel %vm697, %v2106, %v2107
    %v2111 = vsel %vm694, %v2109, %v2110
    %v2112 = vsel %vm340, %v2103, %v2105
    %v2113 = vsel %vm704, %v2106, %v2107
    %vm2114 = vcmask 1042433
    %v2115 = vsel %vm2114, %v2112, %v2113
    %v2116 = vrot.slane %v2115, 1
    %v2117 = vperm.slane %v2111, 0
    %v2118 = vperm.slane %v2111, 1
    %v2119 = vperm.slane %v2111, 2
    %v2120 = vperm.slane %v2116, 0
    %v2121 = vperm.slane %v2116, 1
    %v2122 = vperm.slane %v2116, 2
    %2123 = vrot.lane.b32.xlu0 %v2117, 51
    %v2124 = vpop.permute.xlu0 %2123
    %2125 = vrot.lane.b32.xlu0 %v2118, 51
    %v2126 = vpop.permute.xlu0 %2125
    %2127 = vrot.lane.b32.xlu0 %v2119, 51
    %v2128 = vpop.permute.xlu0 %2127
    %2129 = vrot.lane.b32.xlu0 %v2120, 51
    %v2130 = vpop.permute.xlu0 %2129
    %2131 = vrot.lane.b32.xlu0 %v2121, 51
    %v2132 = vpop.permute.xlu0 %2131
    %2133 = vrot.lane.b32.xlu0 %v2122, 51
    %v2134 = vpop.permute.xlu0 %2133
    %vm2135 = vcmask 416768
    %v2136 = vsel %vm2135, %v2124, %v2126
    %v2137 = vsel %vm2135, %v2126, %v2128
    %v2138 = vsel %vm2135, %v2130, %v2132
    %v2139 = vsel %vm2135, %v2132, %v2134
    %v2144 = vmul.f32 %v594, %v2136
    %v2145 = vmul.f32 %v595, %v2137
    %v2146 = vmul.f32 %v596, %v2136
    %v2147 = vmul.f32 %v597, %v2137
    %v2148 = vmul.f32 %v598, %v2136
    %v2149 = vmul.f32 %v599, %v2137
    %v2150 = vmul.f32 %v600, %v2136
    %v2151 = vmul.f32 %v601, %v2137
    %v2152 = vmul.f32 %v602, %v2138
    %v2153 = vmul.f32 %v603, %v2139
    %v2154 = vmul.f32 %v604, %v2138
    %v2155 = vmul.f32 %v605, %v2139
    %v2156 = vmul.f32 %v606, %v2138
    %v2157 = vmul.f32 %v607, %v2139
    %v2158 = vmul.f32 %v608, %v2138
    %v2159 = vmul.f32 %v609, %v2139
    %2160 = vst [vmem:[#allocation13] sm:$0xff] %v2144
    %2161 = vst [vmem:[#allocation13 + $0x8] sm:$0xff] %v2145
    %2162 = vst [vmem:[#allocation13 + $0x10] sm:$0xff] %v2146
    %2163 = vst [vmem:[#allocation13 + $0x18] sm:$0xff] %v2147
    %2164 = vst [vmem:[#allocation13 + $0x20] sm:$0xff] %v2148
    %2165 = vst [vmem:[#allocation13 + $0x28] sm:$0xff] %v2149
    %2166 = vst [vmem:[#allocation13 + $0x30] sm:$0xff] %v2150
    %2167 = vst [vmem:[#allocation13 + $0x38] sm:$0xff] %v2151
    %2168 = vst [vmem:[#allocation13 + $0x40] sm:$0xff] %v2152
    %2169 = vst [vmem:[#allocation13 + $0x48] sm:$0xff] %v2153
    %2170 = vst [vmem:[#allocation13 + $0x50] sm:$0xff] %v2154
    %2171 = vst [vmem:[#allocation13 + $0x58] sm:$0xff] %v2155
    %2172 = vst [vmem:[#allocation13 + $0x60] sm:$0xff] %v2156
    %2173 = vst [vmem:[#allocation13 + $0x68] sm:$0xff] %v2157
    %2174 = vst [vmem:[#allocation13 + $0x70] sm:$0xff] %v2158
    %2175 = vst [vmem:[#allocation13 + $0x78] sm:$0xff] %v2159
    // Predicated region
    $region42: #{tpu_custom_call.1} parent=1 // pred_check
      _
    $region43: #{tpu_custom_call.1} parent=1 // pred_check_branch
      %2177 = sbr.rel (0) target = $region45
    $region44: #{tpu_custom_call.1} parent=1 // pred_region
      %2179 = vsyncadd [#allocation5], 0
      %s2180 = sshll.u32 [#allocation13], 4
      %s2181 = int_to_ptr.vmem [resolvable:$true] %s2180
      %s2182 = sshll.u32 %s5, 4
      %s2183 = int_to_ptr.hbm [resolvable:$true] %s2182
      %2188 = dma.vmem_to_hbm [thread:$0]  %s2181, 2048, %s2183, [#allocation5], 256, 256, 16
    $region45: #{tpu_custom_call.1} parent=1 // pred_fallthru
      _
    // Predicated region
    $region46: #{tpu_custom_call.1} parent=1 // pred_check
      _
    $region47: #{tpu_custom_call.1} parent=1 // pred_check_branch
      %2190 = sbr.rel (0) target = $region49
    $region48: #{tpu_custom_call.1} parent=1 // pred_region
      %2192 = dma.done [#allocation5], 2048
    $region49: #{tpu_custom_call.1} parent=1 // pred_fallthru
      _
    %2193 = vsyncpa [#allocation4], 1
    %2194 = vsyncpa [#allocation8], 1
    %2195 = vsyncpa [#allocation11], 1
    %2196 = vsyncpa [#allocation5], 1
    %2197 = vsyncpa [#allocation6], 1

</llo_original>
